<compile_context>
chip_gen: v7x
topology: tpu7x:2x2x1
jax: 0.10.0
libtpu: 0.0.40
codegen_flags: <defaults>
</compile_context>

<pallas_src>
import functools

import jax
import jax.numpy as jnp
from jax.experimental import pallas as pl
from jax.experimental.pallas import tpu as pltpu


# ----------------------------------------------------------------------------
# Pallas kernel
# ----------------------------------------------------------------------------
def _mhsa_rpb_kernel(x_ref, wqkv_ref, bqkv_ref, rpb_ref, wp_ref, bp_ref, o_ref,
                     *, num_heads, head_dim, bb, N, C):
    # x_ref: (bb, N, C) block for the current batch slice.
    x2d = x_ref[...].reshape(bb * N, C).astype(jnp.bfloat16)

    # Fused QKV projection: one lane-dense bf16 MXU matmul, f32 accumulation.
    # (The q scale is already folded into the weights/bias on the host.)
    qkv = jnp.dot(x2d, wqkv_ref[...], preferred_element_type=jnp.float32)
    qkv = qkv + bqkv_ref[...]                                    # (bb*N, 3C) f32

    q = qkv[:, :C].reshape(bb, N, C).astype(jnp.bfloat16)
    k = qkv[:, C:2 * C].reshape(bb, N, C).astype(jnp.bfloat16)
    v = qkv[:, 2 * C:].reshape(bb, N, C).astype(jnp.bfloat16)

    acc = jnp.zeros((bb * N, C), jnp.float32)
    for h in range(num_heads):                     # static unroll over heads
        s, e = h * head_dim, (h + 1) * head_dim
        qh, kh, vh = q[:, :, s:e], k[:, :, s:e], v[:, :, s:e]    # (bb, N, hd)

        # Scores: contraction on the last dims (batched over bb) -> no transpose.
        logits = jnp.einsum("bqd,bkd->bqk", qh, kh,
                            preferred_element_type=jnp.float32)  # (bb, N, N)
        logits = logits + rpb_ref[h][None]         # relative position bias
        logits = logits - jnp.max(logits, axis=-1, keepdims=True)
        p = jnp.exp(logits)
        p = p * pl.reciprocal(jnp.sum(p, axis=-1, keepdims=True), approx=True)

        oh = jnp.einsum("bqk,bkd->bqd", p.astype(jnp.bfloat16), vh,
                        preferred_element_type=jnp.float32)      # (bb, N, hd)

        # Fold the output projection per head: lane-dense (width C) accumulation,
        # no lane-crossing concatenate.
        acc = acc + jnp.dot(
            oh.reshape(bb * N, head_dim).astype(jnp.bfloat16),
            wp_ref[s:e, :], preferred_element_type=jnp.float32)  # (bb*N, C)

    out = acc + bp_ref[...]
    o_ref[...] = out.reshape(bb, N, C).astype(o_ref.dtype)


# ----------------------------------------------------------------------------
# Host-side constant preparation (done once per parameter set, cacheable)
# ----------------------------------------------------------------------------
def _relative_position_index(kernel_size):
    ks = kernel_size
    coords = jnp.stack(
        jnp.meshgrid(jnp.arange(ks), jnp.arange(ks), indexing="ij"))  # (2, ks, ks)
    coords_flatten = coords.reshape(2, -1)                            # (2, N)
    rel = coords_flatten[:, :, None] - coords_flatten[:, None, :]     # (2, N, N)
    rel = jnp.transpose(rel, (1, 2, 0))                               # (N, N, 2)
    rc0 = (rel[..., 0] + ks - 1) * (2 * ks - 1)
    rc1 = rel[..., 1] + ks - 1
    return jnp.flipud(jnp.fliplr(rc0 + rc1))                          # (N, N)


def prepare_mhsa_rpb_constants(params, *, kernel_size, num_heads):
    """Weight layout conversion + RPB gather. Call once and reuse per forward."""
    C = params["proj_w"].shape[0]
    N = kernel_size ** 2
    head_dim = C // num_heads
    scale = head_dim ** (-0.5)

    # qkv: PyTorch Linear stores (out, in); transpose to (in, out) = (C, 3C).
    w_qkv = jnp.asarray(params["qkv_w"]).T.astype(jnp.float32)        # (C, 3C)
    b_qkv = jnp.asarray(params["qkv_b"]).reshape(1, 3 * C).astype(jnp.float32)
    # Fold q scale into the Q block (first C output columns): q*scale == x@(Wq*s)+bq*s
    q_scale = jnp.concatenate(
        [jnp.full((3 * C,), scale).at[C:].set(1.0)]).reshape(1, 3 * C)
    w_qkv = (w_qkv * q_scale).astype(jnp.bfloat16)
    b_qkv = b_qkv * q_scale

    w_p = jnp.asarray(params["proj_w"]).T.astype(jnp.bfloat16)        # (C, C)
    b_p = jnp.asarray(params["proj_b"]).reshape(1, C).astype(jnp.float32)

    rpi = _relative_position_index(kernel_size)                       # (N, N)
    tbl = jnp.transpose(params["rpb"], (1, 2, 0)).reshape(-1, num_heads)
    bias = tbl[rpi.reshape(-1)].reshape(N, N, num_heads)
    rpb_bias = jnp.transpose(bias, (2, 0, 1)).astype(jnp.float32)     # (nh, N, N)

    return {"w_qkv": w_qkv, "b_qkv": b_qkv, "w_p": w_p, "b_p": b_p,
            "rpb_bias": rpb_bias}


def _pick_block_batch(B, N, target_rows=256):
    """Choose how many batch elements to fuse per grid step (divisor of B)."""
    bb = max(1, min(B, target_rows // max(N, 1)))
    while bb > 1 and B % bb:
        bb -= 1
    if B // bb < 2:  # keep grid >= 2 when possible (dual-TC chips)
        for cand in range(bb, 0, -1):
            if B % cand == 0 and B // cand >= 2:
                bb = cand
                break
    return bb


# ----------------------------------------------------------------------------
# Forward
# ----------------------------------------------------------------------------
@functools.partial(jax.jit,
                   static_argnames=("kernel_size", "num_heads", "block_batch"))
def mhsa_rpb_forward(x, consts, *, kernel_size, num_heads, block_batch=None):
    """x: (B, H, W, C) float32.  Returns (B, H, W, C)."""
    B, H, W, C = x.shape
    N = H * W
    assert N == kernel_size ** 2, "feature map size must equal kernel_size**2"
    assert C % num_heads == 0
    head_dim = C // num_heads

    bb = block_batch if block_batch is not None else _pick_block_batch(B, N)
    assert B % bb == 0

    x_flat = x.reshape(B, N, C)

    kernel = functools.partial(_mhsa_rpb_kernel, num_heads=num_heads,
                               head_dim=head_dim, bb=bb, N=N, C=C)

    out = pl.pallas_call(
        kernel,
        out_shape=jax.ShapeDtypeStruct((B, N, C), x.dtype),
        grid=(B // bb,),
        in_specs=[
            pl.BlockSpec((bb, N, C), lambda b: (b, 0, 0)),          # x
            pl.BlockSpec((C, 3 * C), lambda b: (0, 0)),             # fused Wqkv
            pl.BlockSpec((1, 3 * C), lambda b: (0, 0)),             # fused bqkv
            pl.BlockSpec((num_heads, N, N), lambda b: (0, 0, 0)),   # rpb bias
            pl.BlockSpec((C, C), lambda b: (0, 0)),                 # Wp
            pl.BlockSpec((1, C), lambda b: (0, 0)),                 # bp
        ],
        out_specs=pl.BlockSpec((bb, N, C), lambda b: (b, 0, 0)),
        compiler_params=pltpu.CompilerParams(
            dimension_semantics=("parallel",),
            vmem_limit_bytes=32 * 1024 * 1024),
    )(x_flat, consts["w_qkv"], consts["b_qkv"], consts["rpb_bias"],
      consts["w_p"], consts["b_p"])

    return out.reshape(B, H, W, C)


# ----------------------------------------------------------------------------
# Pure-JAX reference (mirrors the PyTorch forward; dropout = identity)
# ----------------------------------------------------------------------------
def _reference(x, params, *, kernel_size, num_heads):
    B, H, W, C = x.shape
    N = H * W
    head_dim = C // num_heads
    scale = head_dim ** (-0.5)
    qkv = x.reshape(B, N, C) @ params["qkv_w"].T + params["qkv_b"]
    qkv = qkv.reshape(B, N, 3, num_heads, head_dim).transpose(2, 0, 3, 1, 4)
    q, k, v = qkv[0] * scale, qkv[1], qkv[2]
    attn = jnp.einsum("bhqd,bhkd->bhqk", q, k)
    rpi = _relative_position_index(kernel_size)
    tbl = jnp.transpose(params["rpb"], (1, 2, 0)).reshape(-1, num_heads)
    bias = tbl[rpi.reshape(-1)].reshape(N, N, num_heads).transpose(2, 0, 1)
    attn = jax.nn.softmax(attn + bias[None], axis=-1)
    o = jnp.einsum("bhqk,bhkd->bhqd", attn, v).transpose(0, 2, 1, 3).reshape(B, N, C)
    o = o @ params["proj_w"].T + params["proj_b"]
    return o.reshape(B, H, W, C)


if __name__ == "__main__":
    # Small shapes consistent with the module: dim=32, kernel_size=4 => 4x4 map.
    B, dim, kernel_size, num_heads = 2, 32, 4, 4
    H = W = kernel_size

    key = jax.random.PRNGKey(0)
    k_x, k_qw, k_qb, k_pw, k_pb, k_rpb = jax.random.split(key, 6)

    x = jax.random.normal(k_x, (B, H, W, dim), dtype=jnp.float32)
    params = {
        "qkv_w": jax.random.normal(k_qw, (3 * dim, dim), jnp.float32) * 0.05,
        "qkv_b": jax.random.normal(k_qb, (3 * dim,), jnp.float32) * 0.02,
        "proj_w": jax.random.normal(k_pw, (dim, dim), jnp.float32) * 0.05,
        "proj_b": jax.random.normal(k_pb, (dim,), jnp.float32) * 0.02,
        # trunc_normal_(std=0.02) approximated with a truncated normal draw
        "rpb": 0.02 * jax.random.truncated_normal(
            k_rpb, -2.0, 2.0,
            (num_heads, 2 * kernel_size - 1, 2 * kernel_size - 1), jnp.float32),
    }

    # One-time host-side prep (weight layout + scale fold + RPB gather).
    consts = prepare_mhsa_rpb_constants(params, kernel_size=kernel_size,
                                        num_heads=num_heads)

    out = mhsa_rpb_forward(x, consts, kernel_size=kernel_size,
                           num_heads=num_heads)
    out = jax.block_until_ready(out)

    ref = _reference(x, params, kernel_size=kernel_size, num_heads=num_heads)
    assert out.shape == (B, H, W, dim)
    # bf16 matmuls (f32 accumulation) + approx reciprocal -> looser tolerance.
    assert jnp.allclose(out, ref, atol=2e-2, rtol=2e-2), "mismatch vs reference"
    print("KERNEL_OK")
</pallas_src>

<mosaic_0001>
module attributes {stable_mosaic.version = 11 : i64} {
  func.func @_mhsa_rpb_kernel(%arg0: i32, %arg1: memref<1x16x32xf32, #tpu.memory_space<vmem>>, %arg2: memref<32x96xbf16, #tpu.memory_space<vmem>>, %arg3: memref<1x96xf32, #tpu.memory_space<vmem>>, %arg4: memref<4x16x16xf32, #tpu.memory_space<vmem>>, %arg5: memref<32x32xbf16, #tpu.memory_space<vmem>>, %arg6: memref<1x32xf32, #tpu.memory_space<vmem>>, %arg7: memref<1x16x32xf32, #tpu.memory_space<vmem>>) attributes {dimension_semantics = [#tpu.dimension_semantics<parallel>], iteration_bounds = array<i64: 2>, scalar_prefetch = 0 : i64, scratch_operands = 0 : i64, tpu.core_type = #tpu.core_type<tc>, window_params = [{transform_indices = @transform_0, window_bounds = array<i64: 1, 16, 32>}, {pipeline_mode = #tpu.pipeline_mode<synchronous>, transform_indices = @transform_1, window_bounds = array<i64: 32, 96>}, {pipeline_mode = #tpu.pipeline_mode<synchronous>, transform_indices = @transform_2, window_bounds = array<i64: 1, 96>}, {pipeline_mode = #tpu.pipeline_mode<synchronous>, transform_indices = @transform_3, window_bounds = array<i64: 4, 16, 16>}, {pipeline_mode = #tpu.pipeline_mode<synchronous>, transform_indices = @transform_4, window_bounds = array<i64: 32, 32>}, {pipeline_mode = #tpu.pipeline_mode<synchronous>, transform_indices = @transform_5, window_bounds = array<i64: 1, 32>}, {transform_indices = @transform_6, window_bounds = array<i64: 1, 16, 32>}]} {
    %c0 = arith.constant 0 : index
    %c0_0 = arith.constant 0 : index
    %c0_1 = arith.constant 0 : index
    %0 = vector.load %arg1[%c0, %c0_0, %c0_1] : memref<1x16x32xf32, #tpu.memory_space<vmem>>, vector<1x16x32xf32>
    %1 = vector.shape_cast %0 : vector<1x16x32xf32> to vector<16x32xf32>
    %2 = arith.truncf %1 : vector<16x32xf32> to vector<16x32xbf16>
    %c0_2 = arith.constant 0 : index
    %c0_3 = arith.constant 0 : index
    %3 = vector.load %arg2[%c0_2, %c0_3] : memref<32x96xbf16, #tpu.memory_space<vmem>>, vector<32x96xbf16>
    %cst = arith.constant dense<0.000000e+00> : vector<16x96xf32>
    %4 = tpu.matmul %2, %3, %cst {dimension_numbers = #tpu.dot_dimension_numbers<[1], [0], [0], [1], [0, 0, 1, 1], [], []>} : vector<16x32xbf16>, vector<32x96xbf16>, vector<16x96xf32> -> vector<16x96xf32>
    %c0_4 = arith.constant 0 : index
    %c0_5 = arith.constant 0 : index
    %5 = vector.load %arg3[%c0_4, %c0_5] : memref<1x96xf32, #tpu.memory_space<vmem>>, vector<1x96xf32>
    %6 = vector.broadcast %5 : vector<1x96xf32> to vector<16x96xf32>
    %7 = arith.addf %4, %6 : vector<16x96xf32>
    %8 = vector.extract_strided_slice %7 {offsets = [0, 0], sizes = [16, 32], strides = [1, 1]} : vector<16x96xf32> to vector<16x32xf32>
    %9 = vector.shape_cast %8 : vector<16x32xf32> to vector<1x16x32xf32>
    %10 = arith.truncf %9 : vector<1x16x32xf32> to vector<1x16x32xbf16>
    %11 = vector.extract_strided_slice %7 {offsets = [0, 32], sizes = [16, 32], strides = [1, 1]} : vector<16x96xf32> to vector<16x32xf32>
    %12 = vector.shape_cast %11 : vector<16x32xf32> to vector<1x16x32xf32>
    %13 = arith.truncf %12 : vector<1x16x32xf32> to vector<1x16x32xbf16>
    %14 = vector.extract_strided_slice %7 {offsets = [0, 64], sizes = [16, 32], strides = [1, 1]} : vector<16x96xf32> to vector<16x32xf32>
    %15 = vector.shape_cast %14 : vector<16x32xf32> to vector<1x16x32xf32>
    %16 = arith.truncf %15 : vector<1x16x32xf32> to vector<1x16x32xbf16>
    %cst_6 = arith.constant 0.000000e+00 : f32
    %17 = vector.broadcast %cst_6 : f32 to vector<16x32xf32>
    %18 = vector.extract_strided_slice %10 {offsets = [0, 0, 0], sizes = [1, 16, 8], strides = [1, 1, 1]} : vector<1x16x32xbf16> to vector<1x16x8xbf16>
    %19 = vector.extract_strided_slice %13 {offsets = [0, 0, 0], sizes = [1, 16, 8], strides = [1, 1, 1]} : vector<1x16x32xbf16> to vector<1x16x8xbf16>
    %20 = vector.extract_strided_slice %16 {offsets = [0, 0, 0], sizes = [1, 16, 8], strides = [1, 1, 1]} : vector<1x16x32xbf16> to vector<1x16x8xbf16>
    "tpu.trace_start"() <{level = 10 : i32, message = "bqd,bkd->bqk"}> : () -> ()
    %cst_7 = arith.constant dense<0.000000e+00> : vector<1x16x16xf32>
    %21 = tpu.matmul %18, %19, %cst_7 {dimension_numbers = #tpu.dot_dimension_numbers<[2], [2], [1], [1], [0, 0, 0, 1, 1, 1], [0], [0]>} : vector<1x16x8xbf16>, vector<1x16x8xbf16>, vector<1x16x16xf32> -> vector<1x16x16xf32>
    "tpu.trace_stop"() : () -> ()
    %c0_8 = arith.constant 0 : index
    %c0_9 = arith.constant 0 : index
    %c0_10 = arith.constant 0 : index
    %22 = vector.load %arg4[%c0_8, %c0_9, %c0_10] : memref<4x16x16xf32, #tpu.memory_space<vmem>>, vector<1x16x16xf32>
    %23 = vector.shape_cast %22 : vector<1x16x16xf32> to vector<16x16xf32>
    %24 = vector.shape_cast %23 : vector<16x16xf32> to vector<1x16x16xf32>
    %25 = arith.addf %21, %24 : vector<1x16x16xf32>
    %cst_11 = arith.constant dense<0xFF800000> : vector<1x16xf32>
    %26 = vector.multi_reduction <maximumf>, %25, %cst_11 [2] : vector<1x16x16xf32> to vector<1x16xf32>
    %27 = vector.shape_cast %26 : vector<1x16xf32> to vector<1x16x1xf32>
    %28 = vector.broadcast %27 : vector<1x16x1xf32> to vector<1x16x16xf32>
    %29 = arith.subf %25, %28 : vector<1x16x16xf32>
    %30 = math.exp %29 : vector<1x16x16xf32>
    %cst_12 = arith.constant dense<0.000000e+00> : vector<1x16xf32>
    %31 = vector.multi_reduction <add>, %30, %cst_12 [2] : vector<1x16x16xf32> to vector<1x16xf32>
    %32 = vector.shape_cast %31 : vector<1x16xf32> to vector<1x16x1xf32>
    %33 = tpu.reciprocal %32 {approx = true} : vector<1x16x1xf32> -> vector<1x16x1xf32>
    %34 = vector.broadcast %33 : vector<1x16x1xf32> to vector<1x16x16xf32>
    %35 = arith.mulf %30, %34 : vector<1x16x16xf32>
    %36 = arith.truncf %35 : vector<1x16x16xf32> to vector<1x16x16xbf16>
    "tpu.trace_start"() <{level = 10 : i32, message = "bqk,bkd->bqd"}> : () -> ()
    %cst_13 = arith.constant dense<0.000000e+00> : vector<1x16x8xf32>
    %37 = tpu.matmul %36, %20, %cst_13 {dimension_numbers = #tpu.dot_dimension_numbers<[2], [1], [1], [2], [0, 0, 0, 1, 1, 2], [0], [0]>} : vector<1x16x16xbf16>, vector<1x16x8xbf16>, vector<1x16x8xf32> -> vector<1x16x8xf32>
    "tpu.trace_stop"() : () -> ()
    %38 = vector.shape_cast %37 : vector<1x16x8xf32> to vector<16x8xf32>
    %39 = arith.truncf %38 : vector<16x8xf32> to vector<16x8xbf16>
    %c0_14 = arith.constant 0 : index
    %c0_15 = arith.constant 0 : index
    %40 = vector.load %arg5[%c0_14, %c0_15] : memref<32x32xbf16, #tpu.memory_space<vmem>>, vector<8x32xbf16>
    %cst_16 = arith.constant dense<0.000000e+00> : vector<16x32xf32>
    %41 = tpu.matmul %39, %40, %cst_16 {dimension_numbers = #tpu.dot_dimension_numbers<[1], [0], [0], [1], [0, 0, 1, 1], [], []>} : vector<16x8xbf16>, vector<8x32xbf16>, vector<16x32xf32> -> vector<16x32xf32>
    %42 = arith.addf %17, %41 : vector<16x32xf32>
    %43 = vector.extract_strided_slice %10 {offsets = [0, 0, 8], sizes = [1, 16, 8], strides = [1, 1, 1]} : vector<1x16x32xbf16> to vector<1x16x8xbf16>
    %44 = vector.extract_strided_slice %13 {offsets = [0, 0, 8], sizes = [1, 16, 8], strides = [1, 1, 1]} : vector<1x16x32xbf16> to vector<1x16x8xbf16>
    %45 = vector.extract_strided_slice %16 {offsets = [0, 0, 8], sizes = [1, 16, 8], strides = [1, 1, 1]} : vector<1x16x32xbf16> to vector<1x16x8xbf16>
    "tpu.trace_start"() <{level = 10 : i32, message = "bqd,bkd->bqk"}> : () -> ()
    %cst_17 = arith.constant dense<0.000000e+00> : vector<1x16x16xf32>
    %46 = tpu.matmul %43, %44, %cst_17 {dimension_numbers = #tpu.dot_dimension_numbers<[2], [2], [1], [1], [0, 0, 0, 1, 1, 1], [0], [0]>} : vector<1x16x8xbf16>, vector<1x16x8xbf16>, vector<1x16x16xf32> -> vector<1x16x16xf32>
    "tpu.trace_stop"() : () -> ()
    %c1 = arith.constant 1 : index
    %c0_18 = arith.constant 0 : index
    %c0_19 = arith.constant 0 : index
    %47 = vector.load %arg4[%c1, %c0_18, %c0_19] : memref<4x16x16xf32, #tpu.memory_space<vmem>>, vector<1x16x16xf32>
    %48 = vector.shape_cast %47 : vector<1x16x16xf32> to vector<16x16xf32>
    %49 = vector.shape_cast %48 : vector<16x16xf32> to vector<1x16x16xf32>
    %50 = arith.addf %46, %49 : vector<1x16x16xf32>
    %cst_20 = arith.constant dense<0xFF800000> : vector<1x16xf32>
    %51 = vector.multi_reduction <maximumf>, %50, %cst_20 [2] : vector<1x16x16xf32> to vector<1x16xf32>
    %52 = vector.shape_cast %51 : vector<1x16xf32> to vector<1x16x1xf32>
    %53 = vector.broadcast %52 : vector<1x16x1xf32> to vector<1x16x16xf32>
    %54 = arith.subf %50, %53 : vector<1x16x16xf32>
    %55 = math.exp %54 : vector<1x16x16xf32>
    %cst_21 = arith.constant dense<0.000000e+00> : vector<1x16xf32>
    %56 = vector.multi_reduction <add>, %55, %cst_21 [2] : vector<1x16x16xf32> to vector<1x16xf32>
    %57 = vector.shape_cast %56 : vector<1x16xf32> to vector<1x16x1xf32>
    %58 = tpu.reciprocal %57 {approx = true} : vector<1x16x1xf32> -> vector<1x16x1xf32>
    %59 = vector.broadcast %58 : vector<1x16x1xf32> to vector<1x16x16xf32>
    %60 = arith.mulf %55, %59 : vector<1x16x16xf32>
    %61 = arith.truncf %60 : vector<1x16x16xf32> to vector<1x16x16xbf16>
    "tpu.trace_start"() <{level = 10 : i32, message = "bqk,bkd->bqd"}> : () -> ()
    %cst_22 = arith.constant dense<0.000000e+00> : vector<1x16x8xf32>
    %62 = tpu.matmul %61, %45, %cst_22 {dimension_numbers = #tpu.dot_dimension_numbers<[2], [1], [1], [2], [0, 0, 0, 1, 1, 2], [0], [0]>} : vector<1x16x16xbf16>, vector<1x16x8xbf16>, vector<1x16x8xf32> -> vector<1x16x8xf32>
    "tpu.trace_stop"() : () -> ()
    %63 = vector.shape_cast %62 : vector<1x16x8xf32> to vector<16x8xf32>
    %64 = arith.truncf %63 : vector<16x8xf32> to vector<16x8xbf16>
    %c8 = arith.constant 8 : index
    %c0_23 = arith.constant 0 : index
    %65 = vector.load %arg5[%c8, %c0_23] : memref<32x32xbf16, #tpu.memory_space<vmem>>, vector<8x32xbf16>
    %cst_24 = arith.constant dense<0.000000e+00> : vector<16x32xf32>
    %66 = tpu.matmul %64, %65, %cst_24 {dimension_numbers = #tpu.dot_dimension_numbers<[1], [0], [0], [1], [0, 0, 1, 1], [], []>} : vector<16x8xbf16>, vector<8x32xbf16>, vector<16x32xf32> -> vector<16x32xf32>
    %67 = arith.addf %42, %66 : vector<16x32xf32>
    %68 = vector.extract_strided_slice %10 {offsets = [0, 0, 16], sizes = [1, 16, 8], strides = [1, 1, 1]} : vector<1x16x32xbf16> to vector<1x16x8xbf16>
    %69 = vector.extract_strided_slice %13 {offsets = [0, 0, 16], sizes = [1, 16, 8], strides = [1, 1, 1]} : vector<1x16x32xbf16> to vector<1x16x8xbf16>
    %70 = vector.extract_strided_slice %16 {offsets = [0, 0, 16], sizes = [1, 16, 8], strides = [1, 1, 1]} : vector<1x16x32xbf16> to vector<1x16x8xbf16>
    "tpu.trace_start"() <{level = 10 : i32, message = "bqd,bkd->bqk"}> : () -> ()
    %cst_25 = arith.constant dense<0.000000e+00> : vector<1x16x16xf32>
    %71 = tpu.matmul %68, %69, %cst_25 {dimension_numbers = #tpu.dot_dimension_numbers<[2], [2], [1], [1], [0, 0, 0, 1, 1, 1], [0], [0]>} : vector<1x16x8xbf16>, vector<1x16x8xbf16>, vector<1x16x16xf32> -> vector<1x16x16xf32>
    "tpu.trace_stop"() : () -> ()
    %c2 = arith.constant 2 : index
    %c0_26 = arith.constant 0 : index
    %c0_27 = arith.constant 0 : index
    %72 = vector.load %arg4[%c2, %c0_26, %c0_27] : memref<4x16x16xf32, #tpu.memory_space<vmem>>, vector<1x16x16xf32>
    %73 = vector.shape_cast %72 : vector<1x16x16xf32> to vector<16x16xf32>
    %74 = vector.shape_cast %73 : vector<16x16xf32> to vector<1x16x16xf32>
    %75 = arith.addf %71, %74 : vector<1x16x16xf32>
    %cst_28 = arith.constant dense<0xFF800000> : vector<1x16xf32>
    %76 = vector.multi_reduction <maximumf>, %75, %cst_28 [2] : vector<1x16x16xf32> to vector<1x16xf32>
    %77 = vector.shape_cast %76 : vector<1x16xf32> to vector<1x16x1xf32>
    %78 = vector.broadcast %77 : vector<1x16x1xf32> to vector<1x16x16xf32>
    %79 = arith.subf %75, %78 : vector<1x16x16xf32>
    %80 = math.exp %79 : vector<1x16x16xf32>
    %cst_29 = arith.constant dense<0.000000e+00> : vector<1x16xf32>
    %81 = vector.multi_reduction <add>, %80, %cst_29 [2] : vector<1x16x16xf32> to vector<1x16xf32>
    %82 = vector.shape_cast %81 : vector<1x16xf32> to vector<1x16x1xf32>
    %83 = tpu.reciprocal %82 {approx = true} : vector<1x16x1xf32> -> vector<1x16x1xf32>
    %84 = vector.broadcast %83 : vector<1x16x1xf32> to vector<1x16x16xf32>
    %85 = arith.mulf %80, %84 : vector<1x16x16xf32>
    %86 = arith.truncf %85 : vector<1x16x16xf32> to vector<1x16x16xbf16>
    "tpu.trace_start"() <{level = 10 : i32, message = "bqk,bkd->bqd"}> : () -> ()
    %cst_30 = arith.constant dense<0.000000e+00> : vector<1x16x8xf32>
    %87 = tpu.matmul %86, %70, %cst_30 {dimension_numbers = #tpu.dot_dimension_numbers<[2], [1], [1], [2], [0, 0, 0, 1, 1, 2], [0], [0]>} : vector<1x16x16xbf16>, vector<1x16x8xbf16>, vector<1x16x8xf32> -> vector<1x16x8xf32>
    "tpu.trace_stop"() : () -> ()
    %88 = vector.shape_cast %87 : vector<1x16x8xf32> to vector<16x8xf32>
    %89 = arith.truncf %88 : vector<16x8xf32> to vector<16x8xbf16>
    %c16 = arith.constant 16 : index
    %c0_31 = arith.constant 0 : index
    %90 = vector.load %arg5[%c16, %c0_31] : memref<32x32xbf16, #tpu.memory_space<vmem>>, vector<8x32xbf16>
    %cst_32 = arith.constant dense<0.000000e+00> : vector<16x32xf32>
    %91 = tpu.matmul %89, %90, %cst_32 {dimension_numbers = #tpu.dot_dimension_numbers<[1], [0], [0], [1], [0, 0, 1, 1], [], []>} : vector<16x8xbf16>, vector<8x32xbf16>, vector<16x32xf32> -> vector<16x32xf32>
    %92 = arith.addf %67, %91 : vector<16x32xf32>
    %93 = vector.extract_strided_slice %10 {offsets = [0, 0, 24], sizes = [1, 16, 8], strides = [1, 1, 1]} : vector<1x16x32xbf16> to vector<1x16x8xbf16>
    %94 = vector.extract_strided_slice %13 {offsets = [0, 0, 24], sizes = [1, 16, 8], strides = [1, 1, 1]} : vector<1x16x32xbf16> to vector<1x16x8xbf16>
    %95 = vector.extract_strided_slice %16 {offsets = [0, 0, 24], sizes = [1, 16, 8], strides = [1, 1, 1]} : vector<1x16x32xbf16> to vector<1x16x8xbf16>
    "tpu.trace_start"() <{level = 10 : i32, message = "bqd,bkd->bqk"}> : () -> ()
    %cst_33 = arith.constant dense<0.000000e+00> : vector<1x16x16xf32>
    %96 = tpu.matmul %93, %94, %cst_33 {dimension_numbers = #tpu.dot_dimension_numbers<[2], [2], [1], [1], [0, 0, 0, 1, 1, 1], [0], [0]>} : vector<1x16x8xbf16>, vector<1x16x8xbf16>, vector<1x16x16xf32> -> vector<1x16x16xf32>
    "tpu.trace_stop"() : () -> ()
    %c3 = arith.constant 3 : index
    %c0_34 = arith.constant 0 : index
    %c0_35 = arith.constant 0 : index
    %97 = vector.load %arg4[%c3, %c0_34, %c0_35] : memref<4x16x16xf32, #tpu.memory_space<vmem>>, vector<1x16x16xf32>
    %98 = vector.shape_cast %97 : vector<1x16x16xf32> to vector<16x16xf32>
    %99 = vector.shape_cast %98 : vector<16x16xf32> to vector<1x16x16xf32>
    %100 = arith.addf %96, %99 : vector<1x16x16xf32>
    %cst_36 = arith.constant dense<0xFF800000> : vector<1x16xf32>
    %101 = vector.multi_reduction <maximumf>, %100, %cst_36 [2] : vector<1x16x16xf32> to vector<1x16xf32>
    %102 = vector.shape_cast %101 : vector<1x16xf32> to vector<1x16x1xf32>
    %103 = vector.broadcast %102 : vector<1x16x1xf32> to vector<1x16x16xf32>
    %104 = arith.subf %100, %103 : vector<1x16x16xf32>
    %105 = math.exp %104 : vector<1x16x16xf32>
    %cst_37 = arith.constant dense<0.000000e+00> : vector<1x16xf32>
    %106 = vector.multi_reduction <add>, %105, %cst_37 [2] : vector<1x16x16xf32> to vector<1x16xf32>
    %107 = vector.shape_cast %106 : vector<1x16xf32> to vector<1x16x1xf32>
    %108 = tpu.reciprocal %107 {approx = true} : vector<1x16x1xf32> -> vector<1x16x1xf32>
    %109 = vector.broadcast %108 : vector<1x16x1xf32> to vector<1x16x16xf32>
    %110 = arith.mulf %105, %109 : vector<1x16x16xf32>
    %111 = arith.truncf %110 : vector<1x16x16xf32> to vector<1x16x16xbf16>
    "tpu.trace_start"() <{level = 10 : i32, message = "bqk,bkd->bqd"}> : () -> ()
    %cst_38 = arith.constant dense<0.000000e+00> : vector<1x16x8xf32>
    %112 = tpu.matmul %111, %95, %cst_38 {dimension_numbers = #tpu.dot_dimension_numbers<[2], [1], [1], [2], [0, 0, 0, 1, 1, 2], [0], [0]>} : vector<1x16x16xbf16>, vector<1x16x8xbf16>, vector<1x16x8xf32> -> vector<1x16x8xf32>
    "tpu.trace_stop"() : () -> ()
    %113 = vector.shape_cast %112 : vector<1x16x8xf32> to vector<16x8xf32>
    %114 = arith.truncf %113 : vector<16x8xf32> to vector<16x8xbf16>
    %c24 = arith.constant 24 : index
    %c0_39 = arith.constant 0 : index
    %115 = vector.load %arg5[%c24, %c0_39] : memref<32x32xbf16, #tpu.memory_space<vmem>>, vector<8x32xbf16>
    %cst_40 = arith.constant dense<0.000000e+00> : vector<16x32xf32>
    %116 = tpu.matmul %114, %115, %cst_40 {dimension_numbers = #tpu.dot_dimension_numbers<[1], [0], [0], [1], [0, 0, 1, 1], [], []>} : vector<16x8xbf16>, vector<8x32xbf16>, vector<16x32xf32> -> vector<16x32xf32>
    %117 = arith.addf %92, %116 : vector<16x32xf32>
    %c0_41 = arith.constant 0 : index
    %c0_42 = arith.constant 0 : index
    %118 = vector.load %arg6[%c0_41, %c0_42] : memref<1x32xf32, #tpu.memory_space<vmem>>, vector<1x32xf32>
    %119 = vector.broadcast %118 : vector<1x32xf32> to vector<16x32xf32>
    %120 = arith.addf %117, %119 : vector<16x32xf32>
    %121 = vector.shape_cast %120 : vector<16x32xf32> to vector<1x16x32xf32>
    %c0_43 = arith.constant 0 : index
    %c0_44 = arith.constant 0 : index
    %c0_45 = arith.constant 0 : index
    %122 = vector.load %arg7[%c0_43, %c0_44, %c0_45] : memref<1x16x32xf32, #tpu.memory_space<vmem>>, vector<1x16x32xf32>
    tpu.vector_store %arg7[%c0_43, %c0_44, %c0_45], %121 {strides = array<i32>} : memref<1x16x32xf32, #tpu.memory_space<vmem>>, vector<1x16x32xf32>,
    return
  }
  func.func @transform_0(%arg0: i32) -> (i32, i32, i32) {
    %c0_i32 = arith.constant 0 : i32
    %c0_i32_0 = arith.constant 0 : i32
    %c0_i32_1 = arith.constant 0 : i32
    return %arg0, %c0_i32, %c0_i32_0 : i32, i32, i32
  }
  func.func @transform_1(%arg0: i32) -> (i32, i32) {
    %c0_i32 = arith.constant 0 : i32
    %c0_i32_0 = arith.constant 0 : i32
    %c0_i32_1 = arith.constant 0 : i32
    return %c0_i32, %c0_i32_0 : i32, i32
  }
  func.func @transform_2(%arg0: i32) -> (i32, i32) {
    %c0_i32 = arith.constant 0 : i32
    %c0_i32_0 = arith.constant 0 : i32
    %c0_i32_1 = arith.constant 0 : i32
    return %c0_i32, %c0_i32_0 : i32, i32
  }
  func.func @transform_3(%arg0: i32) -> (i32, i32, i32) {
    %c0_i32 = arith.constant 0 : i32
    %c0_i32_0 = arith.constant 0 : i32
    %c0_i32_1 = arith.constant 0 : i32
    %c0_i32_2 = arith.constant 0 : i32
    return %c0_i32, %c0_i32_0, %c0_i32_1 : i32, i32, i32
  }
  func.func @transform_4(%arg0: i32) -> (i32, i32) {
    %c0_i32 = arith.constant 0 : i32
    %c0_i32_0 = arith.constant 0 : i32
    %c0_i32_1 = arith.constant 0 : i32
    return %c0_i32, %c0_i32_0 : i32, i32
  }
  func.func @transform_5(%arg0: i32) -> (i32, i32) {
    %c0_i32 = arith.constant 0 : i32
    %c0_i32_0 = arith.constant 0 : i32
    %c0_i32_1 = arith.constant 0 : i32
    return %c0_i32, %c0_i32_0 : i32, i32
  }
  func.func @transform_6(%arg0: i32) -> (i32, i32, i32) {
    %c0_i32 = arith.constant 0 : i32
    %c0_i32_0 = arith.constant 0 : i32
    %c0_i32_1 = arith.constant 0 : i32
    return %arg0, %c0_i32, %c0_i32_0 : i32, i32, i32
  }
}

</mosaic_0001>

<llo_original>
// kernel: mhsa_rpb_forward.1
$region0: #{mhsa_rpb_forward.1}
  #allocation0 [shape = 'u32[]', space=smem, size = 0x4, offset = 0x4, fixed_abs, tag = 'smem constant byte address 0x4 - core index']
  #allocation1 [shape = 'u32[144,128]{1,0:T(1,128)}', space=vmem, size = 0x12000, scoped, tag = 'internal scratch']
  %s0 = inlined_call_operand.hbm [shape: f32[2,16,32], index: 0, kind: input, shape index: {}]
  %s1 = inlined_call_operand.vmem [shape: bf16[32,96], index: 1, kind: input, shape index: {}]
  %s2 = inlined_call_operand.vmem [shape: f32[1,96], index: 2, kind: input, shape index: {}]
  %s3 = inlined_call_operand.hbm [shape: f32[4,16,16], index: 3, kind: input, shape index: {}]
  %s4 = inlined_call_operand.hbm [shape: bf16[32,32], index: 4, kind: input, shape index: {}]
  %s5 = inlined_call_operand.vmem [shape: f32[1,32], index: 5, kind: input, shape index: {}]
  %s6 = inlined_call_operand.hbm [shape: f32[2,16,32], index: 6, kind: output, shape index: {}]
  %s7 = sld [smem:[#allocation0]]
  $region69: #{mhsa_rpb_forward.1} parent=0
    _
  %s9 = ssub.s32 1, %s7
  %s10 = scalar_select 0, %s9, %s7
  $region1: #{mhsa_rpb_forward.1} parent=0
    #allocation2 [shape = 'u8[16384]{0}', space=vmem, size = 0x4000, scoped, tag = 'input window, operand 0']
    #allocation3 [shape = 's32[2]{0}', space=sflag, size = 0x8, scoped, tag = 'scoped memory for mhsa_rpb_forward.1']
    #allocation4 [shape = 's32[2]{0}', space=sflag, size = 0x8, scoped, tag = 'scoped memory for mhsa_rpb_forward.1']
    #allocation5 [shape = 'u8[32768]{0}', space=vmem, size = 0x8000, scoped, tag = 'input window, operand 3, single buffered']
    #allocation6 [shape = 's32[1]{0}', space=sflag, size = 0x4, scoped, tag = 'scoped memory for mhsa_rpb_forward.1']
    #allocation7 [shape = 'u8[8192]{0}', space=vmem, size = 0x2000, scoped, tag = 'input window, operand 4, single buffered']
    #allocation8 [shape = 'u8[16384]{0}', space=vmem, size = 0x4000, scoped, tag = 'output window, operand 0']
    %11 = vsyncpa [#allocation3], 0
    %s12 = scalar_lea.sflag [#allocation3], 1
    %13 = vsyncpa %s12, 0
    %14 = vsyncpa [#allocation6], 0
    %15 = vsyncpa [#allocation4], 0
    %s16 = scalar_lea.sflag [#allocation4], 1
    %17 = vsyncpa %s16, 0
    loop: start=0, step=1, limit=4
    $region2: #{mhsa_rpb_forward.1} parent=1 // loop_pre_header
      _
    $region3: #{mhsa_rpb_forward.1} parent=1 // loop_header
      %s19 = sphi 0, %s23
      %p20 = scmp.ge.s32.totalorder %s19, 4
      %s29 = sphi 0, %s31
      %s32 = sphi 0, %s29
      %s33 = sphi 0, %s32
      %s49 = sphi 0, %s33
      %s53 = sphi 0, %s53
      %s55 = sphi 0, %s53
      %s56 = sphi 0, %s55
      %s70 = sphi 0, %s56
      %s74 = sphi 0, %s74
      %s76 = sphi 0, %s74
      %s77 = sphi 0, %s76
      %s91 = sphi 0, %s77
      %s95 = sphi 0, %s95
      %s97 = sphi 0, %s95
      %s98 = sphi 0, %s97
      %s112 = sphi 0, %s98
      %s116 = sphi 0, %s116
      %s118 = sphi 0, %s116
      %s119 = sphi 0, %s118
      %s133 = sphi 0, %s119
      %s137 = sphi 0, %s137
      %s139 = sphi 0, %s137
      %s140 = sphi 0, %s139
      %s154 = sphi 0, %s140
      %s160 = sphi 0, %s162
      %s163 = sphi 0, %s160
      %s164 = sphi 0, %s163
      %s180 = sphi 0, %s164
    $region4: #{mhsa_rpb_forward.1} parent=1 // loop_header_branch
      %22 = sbr.rel (%p20) target = $region8
    $region5: #{mhsa_rpb_forward.1} parent=1 // loop_body
      %s24 = ssub.s32 %s19, 1
      %s25 = ssub.s32 %s19, 2
      %s26 = sadd.s32 %s19, 1
      %s27 = ssub.s32 %s19, %s26
      %p28 = scmp.eq.s32.totalorder %s27, 0
      %s30 = sadd.s32 %s29, 1
      %s31 = scalar_select %p28, %s29, %s30
      %p34 = pneg %p28
      %p35 = scmp.eq.s32.totalorder %s19, 1
      %p36 = por %p34, %p35
      %p37 = scmp.ne.s32.totalorder %s29, %s32
      %p38 = scmp.eq.s32.totalorder %s19, 0
      %p39 = por %p37, %p38
      %p40 = scmp.ne.s32.totalorder %s29, %s32
      %p41 = scmp.eq.s32.totalorder %s24, 1
      %p42 = por %p40, %p41
      %p43 = scmp.ne.s32.totalorder %s32, %s33
      %p44 = scmp.eq.s32.totalorder %s24, 0
      %p45 = por %p43, %p44
      %p46 = scmp.ne.s32.totalorder %s32, %s33
      %p47 = scmp.eq.s32.totalorder %s25, 1
      %p48 = por %p46, %p47
      %p50 = scmp.ne.s32.totalorder %s33, %s49
      %p51 = scmp.eq.s32.totalorder %s25, 0
      %p52 = por %p50, %p51
      %s54 = sadd.s32 %s53, 1
      %p57 = scmp.eq.s32.totalorder %s19, 1
      %p58 = scmp.ne.s32.totalorder %s53, %s55
      %p59 = scmp.eq.s32.totalorder %s19, 0
      %p60 = por %p58, %p59
      %p61 = scmp.ne.s32.totalorder %s53, %s55
      %p62 = scmp.eq.s32.totalorder %s24, 1
      %p63 = por %p61, %p62
      %p64 = scmp.ne.s32.totalorder %s55, %s56
      %p65 = scmp.eq.s32.totalorder %s24, 0
      %p66 = por %p64, %p65
      %p67 = scmp.ne.s32.totalorder %s55, %s56
      %p68 = scmp.eq.s32.totalorder %s25, 1
      %p69 = por %p67, %p68
      %p71 = scmp.ne.s32.totalorder %s56, %s70
      %p72 = scmp.eq.s32.totalorder %s25, 0
      %p73 = por %p71, %p72
      %s75 = sadd.s32 %s74, 1
      %p78 = scmp.eq.s32.totalorder %s19, 1
      %p79 = scmp.ne.s32.totalorder %s74, %s76
      %p80 = scmp.eq.s32.totalorder %s19, 0
      %p81 = por %p79, %p80
      %p82 = scmp.ne.s32.totalorder %s74, %s76
      %p83 = scmp.eq.s32.totalorder %s24, 1
      %p84 = por %p82, %p83
      %p85 = scmp.ne.s32.totalorder %s76, %s77
      %p86 = scmp.eq.s32.totalorder %s24, 0
      %p87 = por %p85, %p86
      %p88 = scmp.ne.s32.totalorder %s76, %s77
      %p89 = scmp.eq.s32.totalorder %s25, 1
      %p90 = por %p88, %p89
      %p92 = scmp.ne.s32.totalorder %s77, %s91
      %p93 = scmp.eq.s32.totalorder %s25, 0
      %p94 = por %p92, %p93
      %s96 = sadd.s32 %s95, 1
      %p99 = scmp.eq.s32.totalorder %s19, 1
      %p100 = scmp.ne.s32.totalorder %s95, %s97
      %p101 = scmp.eq.s32.totalorder %s19, 0
      %p102 = por %p100, %p101
      %p103 = scmp.ne.s32.totalorder %s95, %s97
      %p104 = scmp.eq.s32.totalorder %s24, 1
      %p105 = por %p103, %p104
      %p106 = scmp.ne.s32.totalorder %s97, %s98
      %p107 = scmp.eq.s32.totalorder %s24, 0
      %p108 = por %p106, %p107
      %p109 = scmp.ne.s32.totalorder %s97, %s98
      %p110 = scmp.eq.s32.totalorder %s25, 1
      %p111 = por %p109, %p110
      %p113 = scmp.ne.s32.totalorder %s98, %s112
      %p114 = scmp.eq.s32.totalorder %s25, 0
      %p115 = por %p113, %p114
      %s117 = sadd.s32 %s116, 1
      %p120 = scmp.eq.s32.totalorder %s19, 1
      %p121 = scmp.ne.s32.totalorder %s116, %s118
      %p122 = scmp.eq.s32.totalorder %s19, 0
      %p123 = por %p121, %p122
      %p124 = scmp.ne.s32.totalorder %s116, %s118
      %p125 = scmp.eq.s32.totalorder %s24, 1
      %p126 = por %p124, %p125
      %p127 = scmp.ne.s32.totalorder %s118, %s119
      %p128 = scmp.eq.s32.totalorder %s24, 0
      %p129 = por %p127, %p128
      %p130 = scmp.ne.s32.totalorder %s118, %s119
      %p131 = scmp.eq.s32.totalorder %s25, 1
      %p132 = por %p130, %p131
      %p134 = scmp.ne.s32.totalorder %s119, %s133
      %p135 = scmp.eq.s32.totalorder %s25, 0
      %p136 = por %p134, %p135
      %s138 = sadd.s32 %s137, 1
      %p141 = scmp.eq.s32.totalorder %s19, 1
      %p142 = scmp.ne.s32.totalorder %s137, %s139
      %p143 = scmp.eq.s32.totalorder %s19, 0
      %p144 = por %p142, %p143
      %p145 = scmp.ne.s32.totalorder %s137, %s139
      %p146 = scmp.eq.s32.totalorder %s24, 1
      %p147 = por %p145, %p146
      %p148 = scmp.ne.s32.totalorder %s139, %s140
      %p149 = scmp.eq.s32.totalorder %s24, 0
      %p150 = por %p148, %p149
      %p151 = scmp.ne.s32.totalorder %s139, %s140
      %p152 = scmp.eq.s32.totalorder %s25, 1
      %p153 = por %p151, %p152
      %p155 = scmp.ne.s32.totalorder %s140, %s154
      %p156 = scmp.eq.s32.totalorder %s25, 0
      %p157 = por %p155, %p156
      %s158 = ssub.s32 %s19, %s26
      %p159 = scmp.eq.s32.totalorder %s158, 0
      %s161 = sadd.s32 %s160, 1
      %s162 = scalar_select %p159, %s160, %s161
      %p165 = pneg %p159
      %p166 = scmp.eq.s32.totalorder %s19, 1
      %p167 = por %p165, %p166
      %p168 = scmp.ne.s32.totalorder %s160, %s163
      %p169 = scmp.eq.s32.totalorder %s19, 0
      %p170 = por %p168, %p169
      %p171 = scmp.ne.s32.totalorder %s160, %s163
      %p172 = scmp.eq.s32.totalorder %s24, 1
      %p173 = por %p171, %p172
      %p174 = scmp.ne.s32.totalorder %s163, %s164
      %p175 = scmp.eq.s32.totalorder %s24, 0
      %p176 = por %p174, %p175
      %p177 = scmp.ne.s32.totalorder %s163, %s164
      %p178 = scmp.eq.s32.totalorder %s25, 1
      %p179 = por %p177, %p178
      %p181 = scmp.ne.s32.totalorder %s164, %s180
      %p182 = scmp.eq.s32.totalorder %s25, 0
      %p183 = por %p181, %p182
      %p184 = scmp.le.s32.totalorder 1, %s19
      %p185 = scmp.lt.s32.totalorder %s19, 3
      %p186 = pnand %p184, %p185
      %p187 = pneg %p186
      // Predicated region
      $region9: #{mhsa_rpb_forward.1} parent=5 // pred_check
        _
      $region10: #{mhsa_rpb_forward.1} parent=5 // pred_check_branch
        %189 = sbr.rel (%p186) target = $region12
      $region11: #{mhsa_rpb_forward.1} parent=5 // pred_region
        %s190 = ssub.s32 %s19, 1
        // Predicated region
        $region13: #{mhsa_rpb_forward.1} parent=11 // pred_check
          %p191 = pneg %p66
        $region14: #{mhsa_rpb_forward.1} parent=11 // pred_check_branch
          %193 = sbr.rel (%p191) target = $region16
        $region15: #{mhsa_rpb_forward.1} parent=11 // pred_region
          _
        $region16: #{mhsa_rpb_forward.1} parent=11 // pred_fallthru
          _
        // Predicated region
        $region17: #{mhsa_rpb_forward.1} parent=11 // pred_check
          %p194 = pneg %p87
        $region18: #{mhsa_rpb_forward.1} parent=11 // pred_check_branch
          %196 = sbr.rel (%p194) target = $region20
        $region19: #{mhsa_rpb_forward.1} parent=11 // pred_region
          _
        $region20: #{mhsa_rpb_forward.1} parent=11 // pred_fallthru
          _
        // Predicated region
        $region21: #{mhsa_rpb_forward.1} parent=11 // pred_check
          %p197 = pneg %p108
        $region22: #{mhsa_rpb_forward.1} parent=11 // pred_check_branch
          %199 = sbr.rel (%p197) target = $region24
        $region23: #{mhsa_rpb_forward.1} parent=11 // pred_region
          %s201 = ssub.s32 1024, 1024
          %202 = vsyncadd [#allocation6], %s201
          %s203 = sshll.u32 [#allocation5], 4
          %s204 = int_to_ptr.vmem [resolvable:$true] %s203
          %209 = dma.hbm_to_vmem [thread:$0]  %s3, 1024, %s204, [#allocation6], 128, 128, 8
        $region24: #{mhsa_rpb_forward.1} parent=11 // pred_fallthru
          _
        // Predicated region
        $region25: #{mhsa_rpb_forward.1} parent=11 // pred_check
          %p210 = pneg %p129
        $region26: #{mhsa_rpb_forward.1} parent=11 // pred_check_branch
          %212 = sbr.rel (%p210) target = $region28
        $region27: #{mhsa_rpb_forward.1} parent=11 // pred_region
          %s214 = ssub.s32 256, 256
          %215 = vsyncadd [#allocation6], %s214
          %s216 = sshll.u32 [#allocation7], 4
          %s217 = int_to_ptr.vmem [resolvable:$true] %s216
          %222 = dma.hbm_to_vmem [thread:$0]  %s4, 256, %s217, [#allocation6], 64, 64, 4
        $region28: #{mhsa_rpb_forward.1} parent=11 // pred_fallthru
          _
        // Predicated region
        $region29: #{mhsa_rpb_forward.1} parent=11 // pred_check
          %p223 = pneg %p150
        $region30: #{mhsa_rpb_forward.1} parent=11 // pred_check_branch
          %225 = sbr.rel (%p223) target = $region32
        $region31: #{mhsa_rpb_forward.1} parent=11 // pred_region
          _
        $region32: #{mhsa_rpb_forward.1} parent=11 // pred_fallthru
          _
      $region12: #{mhsa_rpb_forward.1} parent=5 // pred_fallthru
        _
      %p226 = scmp.lt.s32.totalorder %s19, 2
      // Predicated region
      $region33: #{mhsa_rpb_forward.1} parent=5 // pred_check
        %p227 = pneg %p226
      $region34: #{mhsa_rpb_forward.1} parent=5 // pred_check_branch
        %229 = sbr.rel (%p227) target = $region36
      $region35: #{mhsa_rpb_forward.1} parent=5 // pred_region
        // Predicated region
        $region37: #{mhsa_rpb_forward.1} parent=35 // pred_check
          %p230 = pneg %p39
        $region38: #{mhsa_rpb_forward.1} parent=35 // pred_check_branch
          %232 = sbr.rel (%p230) target = $region40
        $region39: #{mhsa_rpb_forward.1} parent=35 // pred_region
          %s233 = sand.u32 %s29, 1
          %s234 = scalar_lea.sflag [#allocation3], %s233
          %s235 = sand.u32 %s29, 1
          %s236 = smul.addr %s235, 16
          %s237 = scalar_lea.vmem [#allocation2], %s236
          %s239 = ssub.s32 256, 256
          %240 = vsyncadd %s234, %s239
          %s241 = smul.addr %s19, 2
          %s242 = smul.addr %s241, 128
          %s243 = scalar_lea.hbm %s0, %s242
          %s244 = sshll.u32 %s237, 4
          %s245 = int_to_ptr.vmem [resolvable:$true] %s244
          %250 = dma.hbm_to_vmem [thread:$0]  %s243, 256, %s245, %s234, 128, 128, 8
        $region40: #{mhsa_rpb_forward.1} parent=35 // pred_fallthru
          _
      $region36: #{mhsa_rpb_forward.1} parent=5 // pred_fallthru
        _
      %p251 = scmp.le.s32.totalorder 1, %s19
      %p252 = scmp.lt.s32.totalorder %s19, 3
      %p253 = pnand %p251, %p252
      %p254 = pneg %p253
      // Predicated region
      $region41: #{mhsa_rpb_forward.1} parent=5 // pred_check
        _
      $region42: #{mhsa_rpb_forward.1} parent=5 // pred_check_branch
        %256 = sbr.rel (%p253) target = $region44
      $region43: #{mhsa_rpb_forward.1} parent=5 // pred_region
        %s257 = ssub.s32 %s19, 1
        %s258 = sand.u32 %s32, 1
        %s259 = scalar_lea.sflag [#allocation3], %s258
        %s260 = sand.u32 %s32, 1
        %s261 = smul.addr %s260, 16
        %s262 = scalar_lea.vmem [#allocation2], %s261
        // Predicated region
        $region45: #{mhsa_rpb_forward.1} parent=43 // pred_check
          %p263 = pneg %p45
        $region46: #{mhsa_rpb_forward.1} parent=43 // pred_check_branch
          %265 = sbr.rel (%p263) target = $region48
        $region47: #{mhsa_rpb_forward.1} parent=43 // pred_region
          %266 = dma.done %s259, 256
        $region48: #{mhsa_rpb_forward.1} parent=43 // pred_fallthru
          _
        // Predicated region
        $region49: #{mhsa_rpb_forward.1} parent=43 // pred_check
          %p267 = pneg %p108
        $region50: #{mhsa_rpb_forward.1} parent=43 // pred_check_branch
          %269 = sbr.rel (%p267) target = $region52
        $region51: #{mhsa_rpb_forward.1} parent=43 // pred_region
          %270 = dma.done [#allocation6], 1024
        $region52: #{mhsa_rpb_forward.1} parent=43 // pred_fallthru
          _
        // Predicated region
        $region53: #{mhsa_rpb_forward.1} parent=43 // pred_check
          %p271 = pneg %p129
        $region54: #{mhsa_rpb_forward.1} parent=43 // pred_check_branch
          %273 = sbr.rel (%p271) target = $region56
        $region55: #{mhsa_rpb_forward.1} parent=43 // pred_region
          %274 = dma.done [#allocation6], 256
        $region56: #{mhsa_rpb_forward.1} parent=43 // pred_fallthru
          _
        %s275 = sand.u32 %s32, 1
        %s276 = scalar_lea.sflag [#allocation3], %s275
        %s277 = sand.u32 %s32, 1
        %s278 = smul.addr %s277, 16
        %s279 = scalar_lea.vmem [#allocation2], %s278
        %p280 = pneg %p45
        %p281 = pneg %p42
        %p282 = pneg %p66
        %p283 = pneg %p63
        %p284 = pneg %p87
        %p285 = pneg %p84
        %p286 = pneg %p108
        %p287 = pneg %p105
        %p288 = pneg %p129
        %p289 = pneg %p126
        %p290 = pneg %p150
        %p291 = pneg %p147
        %p292 = pneg %p176
        %p293 = pneg %p173
        %s294 = sand.u32 %s163, 1
        %s295 = scalar_lea.sflag [#allocation4], %s294
        %s296 = sand.u32 %s163, 1
        %s297 = smul.addr %s296, 16
        %s298 = scalar_lea.vmem [#allocation8], %s297
        %v300 = vld [vmem:[%s262] sm:$0xff]
        %v301 = vld [vmem:[%s262 + $0x8] sm:$0xff]
        %v302 = vpack.c.bf16 %v301, %v300
        %v303 = vld [vmem:[%s1] sm:$0xf]
        %v304 = vld [vmem:[%s1 + $0x4] sm:$0xf]
        %v305 = vld [vmem:[%s1 + $0x8] sm:$0xf]
        %v306 = vld [vmem:[%s1 + $0xc] sm:$0xf]
        %v307 = vld [vmem:[%s2] sm:$0x1]
        %v309 = vlaneseq
        %v310 = vshrl.u32 %v309, 7
        %v311 = vsub.s32 0, %v310
        %v312 = vrot.slane %v307, %v311
        %v318 = vunpack.c.l.b16 %v303
        %v319 = vunpack.c.l.b16 %v304
        %v320 = vunpack.c.l.b16 %v305
        %v321 = vunpack.c.l.b16 %v306
        %v322 = vpack.c.b16 %v319, %v318
        %v323 = vpack.c.b16 %v321, %v320
        %vm326 = vcmask 261120
        %v328 = vsel %vm326, %v302, 0
        %330 = vmatprep.subr.bf16.mxu0 0
        %331 = vmatpush1.bf16.msra.mxu0 %v322
        %332 = vmatprep.subr.bf16.mxu0 0
        %333 = vmatpush1.bf16.msra.mxu0 %v323
        %334 = vmatprep.subr.bf16.mxu0 0
        %335 = vmatpush1.bf16.msra.mxu0 0
        %336 = vmatprep.subr.bf16.mxu0 0
        %337 = vmatpush1.bf16.msra.mxu0 0
        %338 = vmatprep.subr.bf16.mxu0 0
        %339 = vmatpush1.bf16.msra.mxu0 0
        %340 = vmatprep.subr.bf16.mxu0 0
        %341 = vmatpush1.bf16.msra.mxu0 0
        %342 = vmatprep.subr.bf16.mxu0 0
        %343 = vmatpush1.bf16.msra.mxu0 0
        %344 = vmatprep.subr.bf16.mxu0 0
        %345 = vmatpush1.bf16.msra.mxu0 0
        %346 = vmatprep.subr.bf16.mxu0 0
        %347 = vmatpush1.bf16.msra.mxu0 0
        %348 = vmatprep.subr.bf16.mxu0 0
        %349 = vmatpush1.bf16.msra.mxu0 0
        %350 = vmatprep.subr.bf16.mxu0 0
        %351 = vmatpush1.bf16.msra.mxu0 0
        %352 = vmatprep.subr.bf16.mxu0 0
        %353 = vmatpush1.bf16.msra.mxu0 0
        %354 = vmatprep.subr.bf16.mxu0 0
        %355 = vmatpush1.bf16.msra.mxu0 0
        %356 = vmatprep.subr.bf16.mxu0 0
        %357 = vmatpush1.bf16.msra.mxu0 0
        %358 = vmatprep.subr.bf16.mxu0 0
        %359 = vmatpush1.bf16.msra.mxu0 0
        %360 = vmatprep.subr.bf16.mxu0 0
        %361 = vmatpush1.bf16.msra.mxu0 0
        %362 = vmatprep.mubr.bf16.mxu0 0
        %363 = vmatmul.mubr.bf16.gmra.mrb[0].mxu0 %v328
        %v364 = vpop.f32.mrb[0].mxu0
        %v365 = vadd.f32 %v312, %v364
        %v366 = vpop.f32.mrb[0].mxu0
        %v367 = vpop.f32.mrb[0].mxu0
        %v368 = vadd.f32 %v312, %v367
        %v369 = vpop.f32.mrb[0].mxu0
        %370 = vdwg.mxu0
        %v371 = vpack.c.bf16 %v368, %v365
        %v372 = vld [vmem:[#allocation5] sm:$0xff]
        %v373 = vld [vmem:[#allocation5 + $0x8] sm:$0xff]
        %375 = vrot.lane.b32.xlu0 %v371, 96
        %v376 = vpop.permute.xlu0 %375
        %vm377 = vcmask 64512
        %v379 = vsel %vm377, %v371, 0
        %v382 = vsel %vm377, %v376, 0
        %384 = vmatprep.subr.bf16.mxu0 0
        %385 = vmatpush1.bf16.xpose.msra.mxu0 %v382
        %386 = vmatprep.subr.bf16.mxu0 0
        %387 = vmatpush1.bf16.xpose.msra.mxu0 0
        %388 = vmatprep.subr.bf16.mxu0 0
        %389 = vmatpush1.bf16.xpose.msra.mxu0 0
        %390 = vmatprep.subr.bf16.mxu0 0
        %391 = vmatpush1.bf16.xpose.msra.mxu0 0
        %392 = vmatprep.subr.bf16.mxu0 0
        %393 = vmatpush1.bf16.xpose.msra.mxu0 0
        %394 = vmatprep.subr.bf16.mxu0 0
        %395 = vmatpush1.bf16.xpose.msra.mxu0 0
        %396 = vmatprep.subr.bf16.mxu0 0
        %397 = vmatpush1.bf16.xpose.msra.mxu0 0
        %398 = vmatprep.subr.bf16.mxu0 0
        %399 = vmatpush1.bf16.xpose.msra.mxu0 0
        %400 = vmatprep.subr.bf16.mxu0 0
        %401 = vmatpush1.bf16.xpose.msra.mxu0 0
        %402 = vmatprep.subr.bf16.mxu0 0
        %403 = vmatpush1.bf16.xpose.msra.mxu0 0
        %404 = vmatprep.subr.bf16.mxu0 0
        %405 = vmatpush1.bf16.xpose.msra.mxu0 0
        %406 = vmatprep.subr.bf16.mxu0 0
        %407 = vmatpush1.bf16.xpose.msra.mxu0 0
        %408 = vmatprep.subr.bf16.mxu0 0
        %409 = vmatpush1.bf16.xpose.msra.mxu0 0
        %410 = vmatprep.subr.bf16.mxu0 0
        %411 = vmatpush1.bf16.xpose.msra.mxu0 0
        %412 = vmatprep.subr.bf16.mxu0 0
        %413 = vmatpush1.bf16.xpose.msra.mxu0 0
        %414 = vmatprep.subr.bf16.mxu0 0
        %415 = vmatpush1.bf16.xpose.msra.mxu0 0
        %416 = vmatprep.mubr.bf16.mxu0 0
        %417 = vmatmul.mubr.bf16.gmra.mrb[0].mxu0 %v379
        %v418 = vpop.f32.mrb[0].mxu0
        %v419 = vadd.f32 %v372, %v418
        %v420 = vpop.f32.mrb[0].mxu0
        %v421 = vpop.f32.mrb[0].mxu0
        %v422 = vadd.f32 %v373, %v421
        %v423 = vpop.f32.mrb[0].mxu0
        %424 = vdwg.mxu0
        %vm425 = vcmask 130048
        %v426 = vsel %vm425, %v419, -inf
        %427 = vmax.xlane.f32.xlu0 %v426
        %v428 = vpop.xlane.xlu0 %427
        %v429 = vsel %vm425, %v422, -inf
        %430 = vmax.xlane.f32.xlu0 %v429
        %v431 = vpop.xlane.xlu0 %430
        %v432 = vsub.f32 %v419, %v428
        %v433 = vsub.f32 %v422, %v431
        %v434 = vmul.f32 %v432, 1.442695
        %v435 = vpow.pop %v434
        %v436 = vmul.f32 %v433, 1.442695
        %v437 = vpow.pop %v436
        %v438 = vsel %vm425, %v435, 0.0
        %439 = vadd.xlane.f32.xlu0 %v438
        %v440 = vpop.xlane.xlu0 %439
        %v441 = vsel %vm425, %v437, 0.0
        %442 = vadd.xlane.f32.xlu0 %v441
        %v443 = vpop.xlane.xlu0 %442
        %v444 = vrcp.pop %v440
        %v445 = vrcp.pop %v443
        %v446 = vmul.f32 %v435, %v444
        %v447 = vmul.f32 %v437, %v445
        %v448 = vpack.c.bf16 %v447, %v446
        %449 = vrot.lane.b32.xlu0 %v371, 64
        %v450 = vpop.permute.xlu0 %449
        %v453 = vsel %vm425, %v448, 0
        %455 = vmatprep.subr.bf16.mxu0 0
        %456 = vmatpush1.bf16.msra.mxu0 %v450
        %457 = vmatprep.subr.bf16.mxu0 0
        %458 = vmatpush1.bf16.msra.mxu0 0
        %459 = vmatprep.subr.bf16.mxu0 0
        %460 = vmatpush1.bf16.msra.mxu0 0
        %461 = vmatprep.subr.bf16.mxu0 0
        %462 = vmatpush1.bf16.msra.mxu0 0
        %463 = vmatprep.subr.bf16.mxu0 0
        %464 = vmatpush1.bf16.msra.mxu0 0
        %465 = vmatprep.subr.bf16.mxu0 0
        %466 = vmatpush1.bf16.msra.mxu0 0
        %467 = vmatprep.subr.bf16.mxu0 0
        %468 = vmatpush1.bf16.msra.mxu0 0
        %469 = vmatprep.subr.bf16.mxu0 0
        %470 = vmatpush1.bf16.msra.mxu0 0
        %471 = vmatprep.subr.bf16.mxu0 0
        %472 = vmatpush1.bf16.msra.mxu0 0
        %473 = vmatprep.subr.bf16.mxu0 0
        %474 = vmatpush1.bf16.msra.mxu0 0
        %475 = vmatprep.subr.bf16.mxu0 0
        %476 = vmatpush1.bf16.msra.mxu0 0
        %477 = vmatprep.subr.bf16.mxu0 0
        %478 = vmatpush1.bf16.msra.mxu0 0
        %479 = vmatprep.subr.bf16.mxu0 0
        %480 = vmatpush1.bf16.msra.mxu0 0
        %481 = vmatprep.subr.bf16.mxu0 0
        %482 = vmatpush1.bf16.msra.mxu0 0
        %483 = vmatprep.subr.bf16.mxu0 0
        %484 = vmatpush1.bf16.msra.mxu0 0
        %485 = vmatprep.subr.bf16.mxu0 0
        %486 = vmatpush1.bf16.msra.mxu0 0
        %487 = vmatprep.mubr.bf16.mxu0 0
        %488 = vmatmul.mubr.bf16.gmra.mrb[0].mxu0 %v453
        %v489 = vpop.f32.mrb[0].mxu0
        %v490 = vadd.f32 0.0, %v489
        %v491 = vpop.f32.mrb[0].mxu0
        %v492 = vpop.f32.mrb[0].mxu0
        %v493 = vadd.f32 0.0, %v492
        %v494 = vpop.f32.mrb[0].mxu0
        %495 = vdwg.mxu0
        %v496 = vpack.c.bf16 %v493, %v490
        %v497 = vld [vmem:[#allocation7] sm:$0xf]
        %s498 = scalar_lea.vmem [#allocation5], 16
        %v499 = vld [vmem:[%s498] sm:$0xff]
        %v500 = vld [vmem:[%s498 + $0x8] sm:$0xff]
        %501 = vrot.lane.b32.xlu0 %v371, 120
        %v502 = vpop.permute.xlu0 %501
        %503 = vrot.lane.b32.xlu0 %v371, 88
        %v504 = vpop.permute.xlu0 %503
        %v506 = vsel %vm377, %v502, 0
        %v509 = vsel %vm377, %v504, 0
        %511 = vmatprep.subr.bf16.mxu0 0
        %512 = vmatpush1.bf16.xpose.msra.mxu0 %v509
        %513 = vmatprep.subr.bf16.mxu0 0
        %514 = vmatpush1.bf16.xpose.msra.mxu0 0
        %515 = vmatprep.subr.bf16.mxu0 0
        %516 = vmatpush1.bf16.xpose.msra.mxu0 0
        %517 = vmatprep.subr.bf16.mxu0 0
        %518 = vmatpush1.bf16.xpose.msra.mxu0 0
        %519 = vmatprep.subr.bf16.mxu0 0
        %520 = vmatpush1.bf16.xpose.msra.mxu0 0
        %521 = vmatprep.subr.bf16.mxu0 0
        %522 = vmatpush1.bf16.xpose.msra.mxu0 0
        %523 = vmatprep.subr.bf16.mxu0 0
        %524 = vmatpush1.bf16.xpose.msra.mxu0 0
        %525 = vmatprep.subr.bf16.mxu0 0
        %526 = vmatpush1.bf16.xpose.msra.mxu0 0
        %527 = vmatprep.subr.bf16.mxu0 0
        %528 = vmatpush1.bf16.xpose.msra.mxu0 0
        %529 = vmatprep.subr.bf16.mxu0 0
        %530 = vmatpush1.bf16.xpose.msra.mxu0 0
        %531 = vmatprep.subr.bf16.mxu0 0
        %532 = vmatpush1.bf16.xpose.msra.mxu0 0
        %533 = vmatprep.subr.bf16.mxu0 0
        %534 = vmatpush1.bf16.xpose.msra.mxu0 0
        %535 = vmatprep.subr.bf16.mxu0 0
        %536 = vmatpush1.bf16.xpose.msra.mxu0 0
        %537 = vmatprep.subr.bf16.mxu0 0
        %538 = vmatpush1.bf16.xpose.msra.mxu0 0
        %539 = vmatprep.subr.bf16.mxu0 0
        %540 = vmatpush1.bf16.xpose.msra.mxu0 0
        %541 = vmatprep.subr.bf16.mxu0 0
        %542 = vmatpush1.bf16.xpose.msra.mxu0 0
        %543 = vmatprep.mubr.bf16.mxu0 0
        %544 = vmatmul.mubr.bf16.gmra.mrb[0].mxu0 %v506
        %v545 = vpop.f32.mrb[0].mxu0
        %v546 = vadd.f32 %v499, %v545
        %v547 = vpop.f32.mrb[0].mxu0
        %v548 = vpop.f32.mrb[0].mxu0
        %v549 = vadd.f32 %v500, %v548
        %v550 = vpop.f32.mrb[0].mxu0
        %551 = vdwg.mxu0
        %v552 = vsel %vm425, %v546, -inf
        %553 = vmax.xlane.f32.xlu0 %v552
        %v554 = vpop.xlane.xlu0 %553
        %v555 = vsel %vm425, %v549, -inf
        %556 = vmax.xlane.f32.xlu0 %v555
        %v557 = vpop.xlane.xlu0 %556
        %v558 = vsub.f32 %v546, %v554
        %v559 = vsub.f32 %v549, %v557
        %v560 = vmul.f32 %v558, 1.442695
        %v561 = vpow.pop %v560
        %v562 = vmul.f32 %v559, 1.442695
        %v563 = vpow.pop %v562
        %v564 = vsel %vm425, %v561, 0.0
        %565 = vadd.xlane.f32.xlu0 %v564
        %v566 = vpop.xlane.xlu0 %565
        %v567 = vsel %vm425, %v563, 0.0
        %568 = vadd.xlane.f32.xlu0 %v567
        %v569 = vpop.xlane.xlu0 %568
        %v570 = vrcp.pop %v566
        %v571 = vrcp.pop %v569
        %v572 = vmul.f32 %v561, %v570
        %v573 = vmul.f32 %v563, %v571
        %v574 = vpack.c.bf16 %v573, %v572
        %575 = vrot.lane.b32.xlu0 %v371, 56
        %v576 = vpop.permute.xlu0 %575
        %v579 = vsel %vm425, %v574, 0
        %581 = vmatprep.subr.bf16.mxu0 0
        %582 = vmatpush1.bf16.msra.mxu0 %v576
        %583 = vmatprep.subr.bf16.mxu0 0
        %584 = vmatpush1.bf16.msra.mxu0 0
        %585 = vmatprep.subr.bf16.mxu0 0
        %586 = vmatpush1.bf16.msra.mxu0 0
        %587 = vmatprep.subr.bf16.mxu0 0
        %588 = vmatpush1.bf16.msra.mxu0 0
        %589 = vmatprep.subr.bf16.mxu0 0
        %590 = vmatpush1.bf16.msra.mxu0 0
        %591 = vmatprep.subr.bf16.mxu0 0
        %592 = vmatpush1.bf16.msra.mxu0 0
        %593 = vmatprep.subr.bf16.mxu0 0
        %594 = vmatpush1.bf16.msra.mxu0 0
        %595 = vmatprep.subr.bf16.mxu0 0
        %596 = vmatpush1.bf16.msra.mxu0 0
        %597 = vmatprep.subr.bf16.mxu0 0
        %598 = vmatpush1.bf16.msra.mxu0 0
        %599 = vmatprep.subr.bf16.mxu0 0
        %600 = vmatpush1.bf16.msra.mxu0 0
        %601 = vmatprep.subr.bf16.mxu0 0
        %602 = vmatpush1.bf16.msra.mxu0 0
        %603 = vmatprep.subr.bf16.mxu0 0
        %604 = vmatpush1.bf16.msra.mxu0 0
        %605 = vmatprep.subr.bf16.mxu0 0
        %606 = vmatpush1.bf16.msra.mxu0 0
        %607 = vmatprep.subr.bf16.mxu0 0
        %608 = vmatpush1.bf16.msra.mxu0 0
        %609 = vmatprep.subr.bf16.mxu0 0
        %610 = vmatpush1.bf16.msra.mxu0 0
        %611 = vmatprep.subr.bf16.mxu0 0
        %612 = vmatpush1.bf16.msra.mxu0 0
        %613 = vmatprep.mubr.bf16.mxu0 0
        %614 = vmatmul.mubr.bf16.gmra.mrb[0].mxu0 %v579
        %v615 = vpop.f32.mrb[0].mxu0
        %v616 = vadd.f32 0.0, %v615
        %v617 = vpop.f32.mrb[0].mxu0
        %v618 = vpop.f32.mrb[0].mxu0
        %v619 = vadd.f32 0.0, %v618
        %v620 = vpop.f32.mrb[0].mxu0
        %621 = vdwg.mxu0
        %v622 = vpack.c.bf16 %v619, %v616
        %v623 = vld [vmem:[#allocation7 + $0x4] sm:$0xf]
        %v625 = vsel %vm377, %v622, 0
        %vm627 = vcmask 1043456
        %v629 = vsel %vm627, %v623, 0
        %631 = vmatprep.subr.bf16.mxu0 0
        %632 = vmatpush1.bf16.msra.mxu0 %v629
        %633 = vmatprep.subr.bf16.mxu0 0
        %634 = vmatpush1.bf16.msra.mxu0 0
        %635 = vmatprep.subr.bf16.mxu0 0
        %636 = vmatpush1.bf16.msra.mxu0 0
        %637 = vmatprep.subr.bf16.mxu0 0
        %638 = vmatpush1.bf16.msra.mxu0 0
        %639 = vmatprep.subr.bf16.mxu0 0
        %640 = vmatpush1.bf16.msra.mxu0 0
        %641 = vmatprep.subr.bf16.mxu0 0
        %642 = vmatpush1.bf16.msra.mxu0 0
        %643 = vmatprep.subr.bf16.mxu0 0
        %644 = vmatpush1.bf16.msra.mxu0 0
        %645 = vmatprep.subr.bf16.mxu0 0
        %646 = vmatpush1.bf16.msra.mxu0 0
        %647 = vmatprep.subr.bf16.mxu0 0
        %648 = vmatpush1.bf16.msra.mxu0 0
        %649 = vmatprep.subr.bf16.mxu0 0
        %650 = vmatpush1.bf16.msra.mxu0 0
        %651 = vmatprep.subr.bf16.mxu0 0
        %652 = vmatpush1.bf16.msra.mxu0 0
        %653 = vmatprep.subr.bf16.mxu0 0
        %654 = vmatpush1.bf16.msra.mxu0 0
        %655 = vmatprep.subr.bf16.mxu0 0
        %656 = vmatpush1.bf16.msra.mxu0 0
        %657 = vmatprep.subr.bf16.mxu0 0
        %658 = vmatpush1.bf16.msra.mxu0 0
        %659 = vmatprep.subr.bf16.mxu0 0
        %660 = vmatpush1.bf16.msra.mxu0 0
        %661 = vmatprep.subr.bf16.mxu0 0
        %662 = vmatpush1.bf16.msra.mxu0 0
        %663 = vmatprep.mubr.bf16.mxu0 0
        %664 = vmatmul.mubr.bf16.gmra.mrb[0].mxu0 %v625
        %v665 = vpop.f32.mrb[0].mxu0
        %v666 = vadd.f32 0.0, %v665
        %v667 = vpop.f32.mrb[0].mxu0
        %v668 = vpop.f32.mrb[0].mxu0
        %v669 = vadd.f32 0.0, %v668
        %v670 = vpop.f32.mrb[0].mxu0
        %671 = vdwg.mxu0
        %v673 = vsel %vm377, %v496, 0
        %v676 = vsel %vm627, %v497, 0
        %678 = vmatprep.subr.bf16.mxu0 0
        %679 = vmatpush1.bf16.msra.mxu0 %v676
        %680 = vmatprep.subr.bf16.mxu0 0
        %681 = vmatpush1.bf16.msra.mxu0 0
        %682 = vmatprep.subr.bf16.mxu0 0
        %683 = vmatpush1.bf16.msra.mxu0 0
        %684 = vmatprep.subr.bf16.mxu0 0
        %685 = vmatpush1.bf16.msra.mxu0 0
        %686 = vmatprep.subr.bf16.mxu0 0
        %687 = vmatpush1.bf16.msra.mxu0 0
        %688 = vmatprep.subr.bf16.mxu0 0
        %689 = vmatpush1.bf16.msra.mxu0 0
        %690 = vmatprep.subr.bf16.mxu0 0
        %691 = vmatpush1.bf16.msra.mxu0 0
        %692 = vmatprep.subr.bf16.mxu0 0
        %693 = vmatpush1.bf16.msra.mxu0 0
        %694 = vmatprep.subr.bf16.mxu0 0
        %695 = vmatpush1.bf16.msra.mxu0 0
        %696 = vmatprep.subr.bf16.mxu0 0
        %697 = vmatpush1.bf16.msra.mxu0 0
        %698 = vmatprep.subr.bf16.mxu0 0
        %699 = vmatpush1.bf16.msra.mxu0 0
        %700 = vmatprep.subr.bf16.mxu0 0
        %701 = vmatpush1.bf16.msra.mxu0 0
        %702 = vmatprep.subr.bf16.mxu0 0
        %703 = vmatpush1.bf16.msra.mxu0 0
        %704 = vmatprep.subr.bf16.mxu0 0
        %705 = vmatpush1.bf16.msra.mxu0 0
        %706 = vmatprep.subr.bf16.mxu0 0
        %707 = vmatpush1.bf16.msra.mxu0 0
        %708 = vmatprep.subr.bf16.mxu0 0
        %709 = vmatpush1.bf16.msra.mxu0 0
        %710 = vmatprep.mubr.bf16.mxu0 0
        %711 = vmatmul.mubr.bf16.gmra.mrb[0].mxu0 %v673
        %v712 = vpop.f32.mrb[0].mxu0
        %v713 = vadd.f32 %v666, %v712
        %v714 = vpop.f32.mrb[0].mxu0
        %v715 = vpop.f32.mrb[0].mxu0
        %v716 = vadd.f32 %v669, %v715
        %v717 = vpop.f32.mrb[0].mxu0
        %718 = vdwg.mxu0
        %s719 = scalar_lea.vmem [#allocation5], 32
        %v720 = vld [vmem:[%s719] sm:$0xff]
        %v721 = vld [vmem:[%s719 + $0x8] sm:$0xff]
        %722 = vrot.lane.b32.xlu0 %v371, 112
        %v723 = vpop.permute.xlu0 %722
        %724 = vrot.lane.b32.xlu0 %v371, 80
        %v725 = vpop.permute.xlu0 %724
        %v727 = vsel %vm377, %v723, 0
        %v730 = vsel %vm377, %v725, 0
        %732 = vmatprep.subr.bf16.mxu0 0
        %733 = vmatpush1.bf16.xpose.msra.mxu0 %v730
        %734 = vmatprep.subr.bf16.mxu0 0
        %735 = vmatpush1.bf16.xpose.msra.mxu0 0
        %736 = vmatprep.subr.bf16.mxu0 0
        %737 = vmatpush1.bf16.xpose.msra.mxu0 0
        %738 = vmatprep.subr.bf16.mxu0 0
        %739 = vmatpush1.bf16.xpose.msra.mxu0 0
        %740 = vmatprep.subr.bf16.mxu0 0
        %741 = vmatpush1.bf16.xpose.msra.mxu0 0
        %742 = vmatprep.subr.bf16.mxu0 0
        %743 = vmatpush1.bf16.xpose.msra.mxu0 0
        %744 = vmatprep.subr.bf16.mxu0 0
        %745 = vmatpush1.bf16.xpose.msra.mxu0 0
        %746 = vmatprep.subr.bf16.mxu0 0
        %747 = vmatpush1.bf16.xpose.msra.mxu0 0
        %748 = vmatprep.subr.bf16.mxu0 0
        %749 = vmatpush1.bf16.xpose.msra.mxu0 0
        %750 = vmatprep.subr.bf16.mxu0 0
        %751 = vmatpush1.bf16.xpose.msra.mxu0 0
        %752 = vmatprep.subr.bf16.mxu0 0
        %753 = vmatpush1.bf16.xpose.msra.mxu0 0
        %754 = vmatprep.subr.bf16.mxu0 0
        %755 = vmatpush1.bf16.xpose.msra.mxu0 0
        %756 = vmatprep.subr.bf16.mxu0 0
        %757 = vmatpush1.bf16.xpose.msra.mxu0 0
        %758 = vmatprep.subr.bf16.mxu0 0
        %759 = vmatpush1.bf16.xpose.msra.mxu0 0
        %760 = vmatprep.subr.bf16.mxu0 0
        %761 = vmatpush1.bf16.xpose.msra.mxu0 0
        %762 = vmatprep.subr.bf16.mxu0 0
        %763 = vmatpush1.bf16.xpose.msra.mxu0 0
        %764 = vmatprep.mubr.bf16.mxu0 0
        %765 = vmatmul.mubr.bf16.gmra.mrb[0].mxu0 %v727
        %v766 = vpop.f32.mrb[0].mxu0
        %v767 = vadd.f32 %v720, %v766
        %v768 = vpop.f32.mrb[0].mxu0
        %v769 = vpop.f32.mrb[0].mxu0
        %v770 = vadd.f32 %v721, %v769
        %v771 = vpop.f32.mrb[0].mxu0
        %772 = vdwg.mxu0
        %v773 = vsel %vm425, %v767, -inf
        %774 = vmax.xlane.f32.xlu0 %v773
        %v775 = vpop.xlane.xlu0 %774
        %v776 = vsel %vm425, %v770, -inf
        %777 = vmax.xlane.f32.xlu0 %v776
        %v778 = vpop.xlane.xlu0 %777
        %v779 = vsub.f32 %v767, %v775
        %v780 = vsub.f32 %v770, %v778
        %v781 = vmul.f32 %v779, 1.442695
        %v782 = vpow.pop %v781
        %v783 = vmul.f32 %v780, 1.442695
        %v784 = vpow.pop %v783
        %v785 = vsel %vm425, %v782, 0.0
        %786 = vadd.xlane.f32.xlu0 %v785
        %v787 = vpop.xlane.xlu0 %786
        %v788 = vsel %vm425, %v784, 0.0
        %789 = vadd.xlane.f32.xlu0 %v788
        %v790 = vpop.xlane.xlu0 %789
        %v791 = vrcp.pop %v787
        %v792 = vrcp.pop %v790
        %v793 = vmul.f32 %v782, %v791
        %v794 = vmul.f32 %v784, %v792
        %v795 = vpack.c.bf16 %v794, %v793
        %796 = vrot.lane.b32.xlu0 %v371, 48
        %v797 = vpop.permute.xlu0 %796
        %v800 = vsel %vm425, %v795, 0
        %802 = vmatprep.subr.bf16.mxu0 0
        %803 = vmatpush1.bf16.msra.mxu0 %v797
        %804 = vmatprep.subr.bf16.mxu0 0
        %805 = vmatpush1.bf16.msra.mxu0 0
        %806 = vmatprep.subr.bf16.mxu0 0
        %807 = vmatpush1.bf16.msra.mxu0 0
        %808 = vmatprep.subr.bf16.mxu0 0
        %809 = vmatpush1.bf16.msra.mxu0 0
        %810 = vmatprep.subr.bf16.mxu0 0
        %811 = vmatpush1.bf16.msra.mxu0 0
        %812 = vmatprep.subr.bf16.mxu0 0
        %813 = vmatpush1.bf16.msra.mxu0 0
        %814 = vmatprep.subr.bf16.mxu0 0
        %815 = vmatpush1.bf16.msra.mxu0 0
        %816 = vmatprep.subr.bf16.mxu0 0
        %817 = vmatpush1.bf16.msra.mxu0 0
        %818 = vmatprep.subr.bf16.mxu0 0
        %819 = vmatpush1.bf16.msra.mxu0 0
        %820 = vmatprep.subr.bf16.mxu0 0
        %821 = vmatpush1.bf16.msra.mxu0 0
        %822 = vmatprep.subr.bf16.mxu0 0
        %823 = vmatpush1.bf16.msra.mxu0 0
        %824 = vmatprep.subr.bf16.mxu0 0
        %825 = vmatpush1.bf16.msra.mxu0 0
        %826 = vmatprep.subr.bf16.mxu0 0
        %827 = vmatpush1.bf16.msra.mxu0 0
        %828 = vmatprep.subr.bf16.mxu0 0
        %829 = vmatpush1.bf16.msra.mxu0 0
        %830 = vmatprep.subr.bf16.mxu0 0
        %831 = vmatpush1.bf16.msra.mxu0 0
        %832 = vmatprep.subr.bf16.mxu0 0
        %833 = vmatpush1.bf16.msra.mxu0 0
        %834 = vmatprep.mubr.bf16.mxu0 0
        %835 = vmatmul.mubr.bf16.gmra.mrb[0].mxu0 %v800
        %v836 = vpop.f32.mrb[0].mxu0
        %v837 = vadd.f32 0.0, %v836
        %v838 = vpop.f32.mrb[0].mxu0
        %v839 = vpop.f32.mrb[0].mxu0
        %v840 = vadd.f32 0.0, %v839
        %v841 = vpop.f32.mrb[0].mxu0
        %842 = vdwg.mxu0
        %v843 = vpack.c.bf16 %v840, %v837
        %v844 = vld [vmem:[#allocation7 + $0x8] sm:$0xf]
        %v846 = vsel %vm377, %v843, 0
        %v849 = vsel %vm627, %v844, 0
        %851 = vmatprep.subr.bf16.mxu0 0
        %852 = vmatpush1.bf16.msra.mxu0 %v849
        %853 = vmatprep.subr.bf16.mxu0 0
        %854 = vmatpush1.bf16.msra.mxu0 0
        %855 = vmatprep.subr.bf16.mxu0 0
        %856 = vmatpush1.bf16.msra.mxu0 0
        %857 = vmatprep.subr.bf16.mxu0 0
        %858 = vmatpush1.bf16.msra.mxu0 0
        %859 = vmatprep.subr.bf16.mxu0 0
        %860 = vmatpush1.bf16.msra.mxu0 0
        %861 = vmatprep.subr.bf16.mxu0 0
        %862 = vmatpush1.bf16.msra.mxu0 0
        %863 = vmatprep.subr.bf16.mxu0 0
        %864 = vmatpush1.bf16.msra.mxu0 0
        %865 = vmatprep.subr.bf16.mxu0 0
        %866 = vmatpush1.bf16.msra.mxu0 0
        %867 = vmatprep.subr.bf16.mxu0 0
        %868 = vmatpush1.bf16.msra.mxu0 0
        %869 = vmatprep.subr.bf16.mxu0 0
        %870 = vmatpush1.bf16.msra.mxu0 0
        %871 = vmatprep.subr.bf16.mxu0 0
        %872 = vmatpush1.bf16.msra.mxu0 0
        %873 = vmatprep.subr.bf16.mxu0 0
        %874 = vmatpush1.bf16.msra.mxu0 0
        %875 = vmatprep.subr.bf16.mxu0 0
        %876 = vmatpush1.bf16.msra.mxu0 0
        %877 = vmatprep.subr.bf16.mxu0 0
        %878 = vmatpush1.bf16.msra.mxu0 0
        %879 = vmatprep.subr.bf16.mxu0 0
        %880 = vmatpush1.bf16.msra.mxu0 0
        %881 = vmatprep.subr.bf16.mxu0 0
        %882 = vmatpush1.bf16.msra.mxu0 0
        %883 = vmatprep.mubr.bf16.mxu0 0
        %884 = vmatmul.mubr.bf16.gmra.mrb[0].mxu0 %v846
        %v885 = vpop.f32.mrb[0].mxu0
        %v886 = vadd.f32 0.0, %v885
        %v887 = vpop.f32.mrb[0].mxu0
        %v888 = vpop.f32.mrb[0].mxu0
        %v889 = vadd.f32 0.0, %v888
        %v890 = vpop.f32.mrb[0].mxu0
        %891 = vdwg.mxu0
        %v892 = vadd.f32 %v713, %v886
        %v893 = vadd.f32 %v716, %v889
        %s894 = scalar_lea.vmem [#allocation5], 48
        %v895 = vld [vmem:[%s894] sm:$0xff]
        %v896 = vld [vmem:[%s894 + $0x8] sm:$0xff]
        %897 = vrot.lane.b32.xlu0 %v371, 104
        %v898 = vpop.permute.xlu0 %897
        %899 = vrot.lane.b32.xlu0 %v371, 72
        %v900 = vpop.permute.xlu0 %899
        %v902 = vsel %vm377, %v898, 0
        %v905 = vsel %vm377, %v900, 0
        %907 = vmatprep.subr.bf16.mxu0 0
        %908 = vmatpush1.bf16.xpose.msra.mxu0 %v905
        %909 = vmatprep.subr.bf16.mxu0 0
        %910 = vmatpush1.bf16.xpose.msra.mxu0 0
        %911 = vmatprep.subr.bf16.mxu0 0
        %912 = vmatpush1.bf16.xpose.msra.mxu0 0
        %913 = vmatprep.subr.bf16.mxu0 0
        %914 = vmatpush1.bf16.xpose.msra.mxu0 0
        %915 = vmatprep.subr.bf16.mxu0 0
        %916 = vmatpush1.bf16.xpose.msra.mxu0 0
        %917 = vmatprep.subr.bf16.mxu0 0
        %918 = vmatpush1.bf16.xpose.msra.mxu0 0
        %919 = vmatprep.subr.bf16.mxu0 0
        %920 = vmatpush1.bf16.xpose.msra.mxu0 0
        %921 = vmatprep.subr.bf16.mxu0 0
        %922 = vmatpush1.bf16.xpose.msra.mxu0 0
        %923 = vmatprep.subr.bf16.mxu0 0
        %924 = vmatpush1.bf16.xpose.msra.mxu0 0
        %925 = vmatprep.subr.bf16.mxu0 0
        %926 = vmatpush1.bf16.xpose.msra.mxu0 0
        %927 = vmatprep.subr.bf16.mxu0 0
        %928 = vmatpush1.bf16.xpose.msra.mxu0 0
        %929 = vmatprep.subr.bf16.mxu0 0
        %930 = vmatpush1.bf16.xpose.msra.mxu0 0
        %931 = vmatprep.subr.bf16.mxu0 0
        %932 = vmatpush1.bf16.xpose.msra.mxu0 0
        %933 = vmatprep.subr.bf16.mxu0 0
        %934 = vmatpush1.bf16.xpose.msra.mxu0 0
        %935 = vmatprep.subr.bf16.mxu0 0
        %936 = vmatpush1.bf16.xpose.msra.mxu0 0
        %937 = vmatprep.subr.bf16.mxu0 0
        %938 = vmatpush1.bf16.xpose.msra.mxu0 0
        %939 = vmatprep.mubr.bf16.mxu0 0
        %940 = vmatmul.mubr.bf16.gmra.mrb[0].mxu0 %v902
        %v941 = vpop.f32.mrb[0].mxu0
        %v942 = vadd.f32 %v895, %v941
        %v943 = vpop.f32.mrb[0].mxu0
        %v944 = vpop.f32.mrb[0].mxu0
        %v945 = vadd.f32 %v896, %v944
        %v946 = vpop.f32.mrb[0].mxu0
        %947 = vdwg.mxu0
        %v948 = vsel %vm425, %v942, -inf
        %949 = vmax.xlane.f32.xlu0 %v948
        %v950 = vpop.xlane.xlu0 %949
        %v951 = vsel %vm425, %v945, -inf
        %952 = vmax.xlane.f32.xlu0 %v951
        %v953 = vpop.xlane.xlu0 %952
        %v954 = vsub.f32 %v942, %v950
        %v955 = vsub.f32 %v945, %v953
        %v956 = vmul.f32 %v954, 1.442695
        %v957 = vpow.pop %v956
        %v958 = vmul.f32 %v955, 1.442695
        %v959 = vpow.pop %v958
        %v960 = vsel %vm425, %v957, 0.0
        %961 = vadd.xlane.f32.xlu0 %v960
        %v962 = vpop.xlane.xlu0 %961
        %v963 = vsel %vm425, %v959, 0.0
        %964 = vadd.xlane.f32.xlu0 %v963
        %v965 = vpop.xlane.xlu0 %964
        %v966 = vrcp.pop %v962
        %v967 = vrcp.pop %v965
        %v968 = vmul.f32 %v957, %v966
        %v969 = vmul.f32 %v959, %v967
        %v970 = vpack.c.bf16 %v969, %v968
        %971 = vrot.lane.b32.xlu0 %v371, 40
        %v972 = vpop.permute.xlu0 %971
        %v975 = vsel %vm425, %v970, 0
        %977 = vmatprep.subr.bf16.mxu0 0
        %978 = vmatpush1.bf16.msra.mxu0 %v972
        %979 = vmatprep.subr.bf16.mxu0 0
        %980 = vmatpush1.bf16.msra.mxu0 0
        %981 = vmatprep.subr.bf16.mxu0 0
        %982 = vmatpush1.bf16.msra.mxu0 0
        %983 = vmatprep.subr.bf16.mxu0 0
        %984 = vmatpush1.bf16.msra.mxu0 0
        %985 = vmatprep.subr.bf16.mxu0 0
        %986 = vmatpush1.bf16.msra.mxu0 0
        %987 = vmatprep.subr.bf16.mxu0 0
        %988 = vmatpush1.bf16.msra.mxu0 0
        %989 = vmatprep.subr.bf16.mxu0 0
        %990 = vmatpush1.bf16.msra.mxu0 0
        %991 = vmatprep.subr.bf16.mxu0 0
        %992 = vmatpush1.bf16.msra.mxu0 0
        %993 = vmatprep.subr.bf16.mxu0 0
        %994 = vmatpush1.bf16.msra.mxu0 0
        %995 = vmatprep.subr.bf16.mxu0 0
        %996 = vmatpush1.bf16.msra.mxu0 0
        %997 = vmatprep.subr.bf16.mxu0 0
        %998 = vmatpush1.bf16.msra.mxu0 0
        %999 = vmatprep.subr.bf16.mxu0 0
        %1000 = vmatpush1.bf16.msra.mxu0 0
        %1001 = vmatprep.subr.bf16.mxu0 0
        %1002 = vmatpush1.bf16.msra.mxu0 0
        %1003 = vmatprep.subr.bf16.mxu0 0
        %1004 = vmatpush1.bf16.msra.mxu0 0
        %1005 = vmatprep.subr.bf16.mxu0 0
        %1006 = vmatpush1.bf16.msra.mxu0 0
        %1007 = vmatprep.subr.bf16.mxu0 0
        %1008 = vmatpush1.bf16.msra.mxu0 0
        %1009 = vmatprep.mubr.bf16.mxu0 0
        %1010 = vmatmul.mubr.bf16.gmra.mrb[0].mxu0 %v975
        %v1011 = vpop.f32.mrb[0].mxu0
        %v1012 = vadd.f32 0.0, %v1011
        %v1013 = vpop.f32.mrb[0].mxu0
        %v1014 = vpop.f32.mrb[0].mxu0
        %v1015 = vadd.f32 0.0, %v1014
        %v1016 = vpop.f32.mrb[0].mxu0
        %1017 = vdwg.mxu0
        %v1018 = vpack.c.bf16 %v1015, %v1012
        %v1019 = vld [vmem:[#allocation7 + $0xc] sm:$0xf]
        %v1021 = vsel %vm377, %v1018, 0
        %v1024 = vsel %vm627, %v1019, 0
        %1026 = vmatprep.subr.bf16.mxu0 0
        %1027 = vmatpush1.bf16.msra.mxu0 %v1024
        %1028 = vmatprep.subr.bf16.mxu0 0
        %1029 = vmatpush1.bf16.msra.mxu0 0
        %1030 = vmatprep.subr.bf16.mxu0 0
        %1031 = vmatpush1.bf16.msra.mxu0 0
        %1032 = vmatprep.subr.bf16.mxu0 0
        %1033 = vmatpush1.bf16.msra.mxu0 0
        %1034 = vmatprep.subr.bf16.mxu0 0
        %1035 = vmatpush1.bf16.msra.mxu0 0
        %1036 = vmatprep.subr.bf16.mxu0 0
        %1037 = vmatpush1.bf16.msra.mxu0 0
        %1038 = vmatprep.subr.bf16.mxu0 0
        %1039 = vmatpush1.bf16.msra.mxu0 0
        %1040 = vmatprep.subr.bf16.mxu0 0
        %1041 = vmatpush1.bf16.msra.mxu0 0
        %1042 = vmatprep.subr.bf16.mxu0 0
        %1043 = vmatpush1.bf16.msra.mxu0 0
        %1044 = vmatprep.subr.bf16.mxu0 0
        %1045 = vmatpush1.bf16.msra.mxu0 0
        %1046 = vmatprep.subr.bf16.mxu0 0
        %1047 = vmatpush1.bf16.msra.mxu0 0
        %1048 = vmatprep.subr.bf16.mxu0 0
        %1049 = vmatpush1.bf16.msra.mxu0 0
        %1050 = vmatprep.subr.bf16.mxu0 0
        %1051 = vmatpush1.bf16.msra.mxu0 0
        %1052 = vmatprep.subr.bf16.mxu0 0
        %1053 = vmatpush1.bf16.msra.mxu0 0
        %1054 = vmatprep.subr.bf16.mxu0 0
        %1055 = vmatpush1.bf16.msra.mxu0 0
        %1056 = vmatprep.subr.bf16.mxu0 0
        %1057 = vmatpush1.bf16.msra.mxu0 0
        %1058 = vmatprep.mubr.bf16.mxu0 0
        %1059 = vmatmul.mubr.bf16.gmra.mrb[0].mxu0 %v1021
        %v1060 = vpop.f32.mrb[0].mxu0
        %v1061 = vadd.f32 0.0, %v1060
        %v1062 = vpop.f32.mrb[0].mxu0
        %v1063 = vpop.f32.mrb[0].mxu0
        %v1064 = vadd.f32 0.0, %v1063
        %v1065 = vpop.f32.mrb[0].mxu0
        %1066 = vdwg.mxu0
        %v1067 = vadd.f32 %v892, %v1061
        %v1068 = vadd.f32 %v893, %v1064
        %v1069 = vld [vmem:[%s5] sm:$0x1]
        %v1071 = vlaneseq
        %v1072 = vshrl.u32 %v1071, 7
        %v1073 = vsub.s32 0, %v1072
        %v1074 = vrot.slane %v1069, %v1073
        %v1076 = vadd.f32 %v1067, %v1074
        %v1077 = vadd.f32 %v1068, %v1074
        %1078 = vst.msk [vmem:[%s298] sm:$0xff] %vm326, %v1076
        %1079 = vst.msk [vmem:[%s298 + $0x8] sm:$0xff] %vm326, %v1077
        %s1080 = sand.u32 %s163, 1
        %s1081 = scalar_lea.sflag [#allocation4], %s1080
        %s1082 = sand.u32 %s163, 1
        %s1083 = smul.addr %s1082, 16
        %s1084 = scalar_lea.vmem [#allocation8], %s1083
        // Predicated region
        $region57: #{mhsa_rpb_forward.1} parent=43 // pred_check
          %p1085 = pneg %p173
        $region58: #{mhsa_rpb_forward.1} parent=43 // pred_check_branch
          %1087 = sbr.rel (%p1085) target = $region60
        $region59: #{mhsa_rpb_forward.1} parent=43 // pred_region
          %s1089 = ssub.s32 256, 256
          %1090 = vsyncadd %s1081, %s1089
          %s1091 = smul.addr %s24, 2
          %s1092 = smul.addr %s1091, 128
          %s1093 = scalar_lea.hbm %s6, %s1092
          %s1094 = sshll.u32 %s1084, 4
          %s1095 = int_to_ptr.vmem [resolvable:$true] %s1094
          %1100 = dma.vmem_to_hbm [thread:$0]  %s1095, 256, %s1093, %s1081, 128, 128, 8
        $region60: #{mhsa_rpb_forward.1} parent=43 // pred_fallthru
          _
      $region44: #{mhsa_rpb_forward.1} parent=5 // pred_fallthru
        _
      %p1101 = scmp.le.s32.totalorder 2, %s19
      // Predicated region
      $region61: #{mhsa_rpb_forward.1} parent=5 // pred_check
        %p1102 = pneg %p1101
      $region62: #{mhsa_rpb_forward.1} parent=5 // pred_check_branch
        %1104 = sbr.rel (%p1102) target = $region64
      $region63: #{mhsa_rpb_forward.1} parent=5 // pred_region
        %s1105 = ssub.s32 %s19, 2
        // Predicated region
        $region65: #{mhsa_rpb_forward.1} parent=63 // pred_check
          %p1106 = pneg %p179
        $region66: #{mhsa_rpb_forward.1} parent=63 // pred_check_branch
          %1108 = sbr.rel (%p1106) target = $region68
        $region67: #{mhsa_rpb_forward.1} parent=63 // pred_region
          %s1109 = sand.u32 %s164, 1
          %s1110 = scalar_lea.sflag [#allocation4], %s1109
          %s1111 = sand.u32 %s164, 1
          %s1112 = smul.addr %s1111, 16
          %s1113 = scalar_lea.vmem [#allocation8], %s1112
          %1114 = dma.done %s1110, 256
        $region68: #{mhsa_rpb_forward.1} parent=63 // pred_fallthru
          _
      $region64: #{mhsa_rpb_forward.1} parent=5 // pred_fallthru
        _
    $region6: #{mhsa_rpb_forward.1} parent=1 // loop_footer
      %s23 = sadd.s32 1, %s19
    $region7: #{mhsa_rpb_forward.1} parent=1 // loop_footer_branch
      %18 = sbr.rel target = $region3
    $region8: #{mhsa_rpb_forward.1} parent=1 // loop_exit
      _
    %1115 = vsyncpa [#allocation3], 1
    %s1116 = scalar_lea.sflag [#allocation3], 1
    %1117 = vsyncpa %s1116, 1
    %1118 = vsyncpa [#allocation6], 1
    %1119 = vsyncpa [#allocation4], 1
    %s1120 = scalar_lea.sflag [#allocation4], 1
    %1121 = vsyncpa %s1120, 1

</llo_original>
